<compile_context>
chip_gen: v5e
topology: v5e:2x2
jax: 0.10.0
libtpu: 0.0.40
codegen_flags: <defaults>
</compile_context>

<pallas_src>
import functools

import jax
import jax.numpy as jnp
from jax import lax
from jax.experimental import pallas as pl
from jax.experimental.pallas import tpu as pltpu

EPS = 1e-5
LANE = 128
SUB_BF16 = 16                      # bf16 sublane packing: keep tile a multiple

H_IN, H1, H2 = 784, 364, 52


def _round_up(n, m):
    return (n + m - 1) // m * m


H1P = _round_up(H1, LANE)          # 384
H2P = _round_up(H2, LANE)          # 128


def _pad2(a, rows, cols):
    return jnp.pad(a, ((0, rows - a.shape[0]), (0, cols - a.shape[1])))


# --------------------------------------------------------------------------- #
# Kernel: grid = (3 phases, n_tiles batch tiles), both axes sequential.
# --------------------------------------------------------------------------- #
def flatnet_kernel(x_ref, w1_ref, vec1_ref, w2_ref, vec2_ref, w3_ref, b3_ref,
                   out_ref, h1_ref, h2_ref, stat1_ref, ss1_ref, stat2_ref,
                   ss2_ref, *, batch, tile, padded_batch):
    # vecN_ref rows: [0]=bias, [1]=gamma, [2]=beta (f32, zero-padded lanes
    # stay exactly 0 through ReLU/BN, so everything runs unmasked).
    p = pl.program_id(0)
    i = pl.program_id(1)
    row0 = pl.multiple_of(i * tile, tile)
    inv_b = 1.0 / batch

    def masked(h):
        # Zero out rows past the true batch so BN sums are exact.  Compiled
        # away entirely when the batch is a multiple of the tile.
        if padded_batch == batch:
            return h
        ridx = lax.broadcasted_iota(jnp.int32, (tile, 1), 0) + i * tile
        return jnp.where(ridx < batch, h, 0.0)

    # ---- phase 0: fc1 + ReLU, stash h1, accumulate BN1 stats ----
    @pl.when(p == 0)
    def _():
        @pl.when(i == 0)
        def _():
            stat1_ref[...] = jnp.zeros_like(stat1_ref)
            stat2_ref[...] = jnp.zeros_like(stat2_ref)

        h = jnp.dot(x_ref[...].astype(jnp.bfloat16), w1_ref[...],
                    preferred_element_type=jnp.float32)
        h = jnp.maximum(h + vec1_ref[0:1, :], 0.0)
        hb = h.astype(jnp.bfloat16)                    # stored / normalized form
        h1_ref[pl.ds(row0, tile), :] = hb
        hv = masked(hb.astype(jnp.float32))
        stat1_ref[0:1, :] += jnp.sum(hv, axis=0, keepdims=True)
        stat1_ref[1:2, :] += jnp.sum(hv * hv, axis=0, keepdims=True)

    # ---- phase 1: BN1 (fused scale/shift), fc2 + ReLU, BN2 stats ----
    @pl.when(p == 1)
    def _():
        @pl.when(i == 0)
        def _():
            # TODO(synk): E[h^2]-mu^2 is cancellation-prone when |mu|>>sigma;
            # switch to a shifted/Welford accumulation if that regime matters.
            mu = stat1_ref[0:1, :] * inv_b
            var = jnp.maximum(stat1_ref[1:2, :] * inv_b - mu * mu, 0.0)
            scale = vec1_ref[1:2, :] * lax.rsqrt(var + EPS)
            ss1_ref[0:1, :] = scale
            ss1_ref[1:2, :] = vec1_ref[2:3, :] - mu * scale

        h1 = h1_ref[pl.ds(row0, tile), :].astype(jnp.float32)
        h1 = h1 * ss1_ref[0:1, :] + ss1_ref[1:2, :]
        h2 = jnp.dot(h1.astype(jnp.bfloat16), w2_ref[...],
                     preferred_element_type=jnp.float32)
        h2 = jnp.maximum(h2 + vec2_ref[0:1, :], 0.0)
        h2b = h2.astype(jnp.bfloat16)
        h2_ref[pl.ds(row0, tile), :] = h2b
        hv = masked(h2b.astype(jnp.float32))
        stat2_ref[0:1, :] += jnp.sum(hv, axis=0, keepdims=True)
        stat2_ref[1:2, :] += jnp.sum(hv * hv, axis=0, keepdims=True)

    # ---- phase 2: BN2 apply, fc3 (lane-dense padded logits) ----
    @pl.when(p == 2)
    def _():
        @pl.when(i == 0)
        def _():
            mu = stat2_ref[0:1, :] * inv_b
            var = jnp.maximum(stat2_ref[1:2, :] * inv_b - mu * mu, 0.0)
            scale = vec2_ref[1:2, :] * lax.rsqrt(var + EPS)
            ss2_ref[0:1, :] = scale
            ss2_ref[1:2, :] = vec2_ref[2:3, :] - mu * scale

        h2 = h2_ref[pl.ds(row0, tile), :].astype(jnp.float32)
        h2 = h2 * ss2_ref[0:1, :] + ss2_ref[1:2, :]
        out_ref[...] = (jnp.dot(h2.astype(jnp.bfloat16), w3_ref[...],
                                preferred_element_type=jnp.float32)
                        + b3_ref[...]).astype(out_ref.dtype)


# --------------------------------------------------------------------------- #
# Wrapper
# --------------------------------------------------------------------------- #
def prepare_params(params):
    """Pad feature dims to lane multiples, cast weights bf16, pack vectors."""
    (w1, b1, g1, be1, w2, b2, g2, be2, w3, b3) = params
    n_classes = w3.shape[1]
    c_pad = _round_up(n_classes, LANE)

    w1p = _pad2(w1, H_IN, H1P).astype(jnp.bfloat16)     # K kept at 784 (no pad)
    w2p = _pad2(w2, H1P, H2P).astype(jnp.bfloat16)
    w3p = _pad2(w3, H2P, c_pad).astype(jnp.bfloat16)
    vec1 = jnp.concatenate(
        [_pad2(b1, 1, H1P), _pad2(g1, 1, H1P), _pad2(be1, 1, H1P)], axis=0)
    vec2 = jnp.concatenate(
        [_pad2(b2, 1, H2P), _pad2(g2, 1, H2P), _pad2(be2, 1, H2P)], axis=0)
    b3p = _pad2(b3, 1, c_pad)
    return (w1p, vec1, w2p, vec2, w3p, b3p), n_classes, c_pad


def _vmem_limit_bytes(tile, bp, c_pad):
    x_tile = tile * H_IN * 4
    out_tile = tile * c_pad * 4
    w_bytes = (H_IN * H1P + H1P * H2P + H2P * c_pad) * 2
    vec_bytes = (8 * H1P + 8 * H2P + 8 * c_pad) * 4
    scratch = bp * (H1P + H2P) * 2 + (8 * H1P + 8 * H2P) * 2 * 4
    temps = tile * H1P * 4 * 4
    need = (2 * (x_tile + out_tile) + 2 * (w_bytes + vec_bytes)
            + scratch + temps + (2 << 20))
    try:
        cap = pltpu.get_tpu_info().vmem_capacity_bytes
    except Exception:
        cap = 64 << 20                      # most conservative (v7x per-TC)
    return int(min(max(need, 8 << 20), (cap * 3) // 4))


def flatnet_forward(x_nchw, params, tb_max=256):
    """x_nchw: (B, C, H, W) float with C*H*W == 784.  Returns (B, n_classes) f32."""
    B = x_nchw.shape[0]
    x = x_nchw.reshape(B, -1).astype(jnp.float32)   # torch .view; stays f32 in HBM
    assert x.shape[1] == H_IN

    tile = _round_up(min(tb_max, _round_up(B, SUB_BF16)), SUB_BF16)
    n_tiles = pl.cdiv(B, tile)
    bp = n_tiles * tile
    if bp != B:
        x = jnp.pad(x, ((0, bp - B), (0, 0)))       # padded rows masked in stats

    (w1p, vec1, w2p, vec2, w3p, b3p), n_classes, c_pad = prepare_params(params)
    kernel = functools.partial(flatnet_kernel, batch=B, tile=tile, padded_batch=bp)

    last = n_tiles - 1
    grid_spec = pltpu.PrefetchScalarGridSpec(
        num_scalar_prefetch=0,
        grid=(3, n_tiles),
        in_specs=[
            # x only consumed in phase 0; pin its block afterwards so the
            # unchanged block index suppresses any further DMA.
            pl.BlockSpec((tile, H_IN),
                         lambda p, i: (jnp.where(p == 0, i, last), 0)),
            pl.BlockSpec((H_IN, H1P), lambda p, i: (0, 0)),   # weights stay
            pl.BlockSpec((3, H1P), lambda p, i: (0, 0)),      # VMEM-resident
            pl.BlockSpec((H1P, H2P), lambda p, i: (0, 0)),
            pl.BlockSpec((3, H2P), lambda p, i: (0, 0)),
            pl.BlockSpec((H2P, c_pad), lambda p, i: (0, 0)),
            pl.BlockSpec((1, c_pad), lambda p, i: (0, 0)),
        ],
        # Output only produced in phase 2; pin the block index before that so
        # nothing gets written back early.
        out_specs=pl.BlockSpec((tile, c_pad),
                               lambda p, i: (jnp.where(p == 2, i, 0), 0)),
        scratch_shapes=[
            pltpu.VMEM((bp, H1P), jnp.bfloat16),   # h1 (post-ReLU, pre-BN)
            pltpu.VMEM((bp, H2P), jnp.bfloat16),   # h2
            pltpu.VMEM((2, H1P), jnp.float32),     # BN1 [sum; sumsq]
            pltpu.VMEM((2, H1P), jnp.float32),     # BN1 [scale; shift]
            pltpu.VMEM((2, H2P), jnp.float32),     # BN2 [sum; sumsq]
            pltpu.VMEM((2, H2P), jnp.float32),     # BN2 [scale; shift]
        ],
    )

    out_padded = pl.pallas_call(
        kernel,
        out_shape=jax.ShapeDtypeStruct((bp, c_pad), jnp.float32),
        grid_spec=grid_spec,
        compiler_params=pltpu.CompilerParams(
            # TODO(synk): on v7x, shard the tile axis across both TensorCores
            # (core_parallel) and combine per-core BN partials via CMEM.
            dimension_semantics=("arbitrary", "arbitrary"),
            vmem_limit_bytes=_vmem_limit_bytes(tile, bp, c_pad)),
    )(x, w1p, vec1, w2p, vec2, w3p, b3p)

    return out_padded[:B, :n_classes]               # drop batch + lane padding


# --------------------------------------------------------------------------- #
# Params + references
# --------------------------------------------------------------------------- #
def init_params(key, n_classes=10):
    """Deterministic init mimicking PyTorch defaults (U(-1/sqrt(fan_in), +))."""
    def linear(key, fan_in, fan_out):
        kw, kb = jax.random.split(key)
        bound = 1.0 / jnp.sqrt(fan_in)
        # stored as (in, out) == transpose of torch's (out, in) weight
        w = jax.random.uniform(kw, (fan_in, fan_out), jnp.float32, -bound, bound)
        b = jax.random.uniform(kb, (1, fan_out), jnp.float32, -bound, bound)
        return w, b

    k1, k2, k3 = jax.random.split(key, 3)
    w1, b1 = linear(k1, H_IN, H1)
    w2, b2 = linear(k2, H1, H2)
    w3, b3 = linear(k3, H2, n_classes)
    g1, be1 = jnp.ones((1, H1), jnp.float32), jnp.zeros((1, H1), jnp.float32)
    g2, be2 = jnp.ones((1, H2), jnp.float32), jnp.zeros((1, H2), jnp.float32)
    return (w1, b1, g1, be1, w2, b2, g2, be2, w3, b3)


def reference_forward_bf16(x_nchw, params):
    """Pure-JAX mirror of the kernel's exact arithmetic (bf16 MXU, f32 stats,
    bf16-rounded intermediate activations)."""
    (w1, b1, g1, be1, w2, b2, g2, be2, w3, b3) = params
    x = x_nchw.reshape(x_nchw.shape[0], -1)

    def mm(a, w):
        return jnp.dot(a.astype(jnp.bfloat16), w.astype(jnp.bfloat16),
                       preferred_element_type=jnp.float32)

    def layer(a, w, b, g, be):
        h = jnp.maximum(mm(a, w) + b, 0.0)
        h = h.astype(jnp.bfloat16).astype(jnp.float32)   # kernel stashes bf16
        mu = jnp.sum(h, axis=0, keepdims=True) * (1.0 / h.shape[0])
        ex2 = jnp.sum(h * h, axis=0, keepdims=True) * (1.0 / h.shape[0])
        var = jnp.maximum(ex2 - mu * mu, 0.0)
        scale = g * lax.rsqrt(var + EPS)
        return h * scale + (be - mu * scale)

    h = layer(x, w1, b1, g1, be1)
    h = layer(h, w2, b2, g2, be2)
    return mm(h, w3) + b3


def reference_forward_f32(x_nchw, params):
    """Full-f32 PyTorch-style semantics (training-mode BN, biased variance)."""
    (w1, b1, g1, be1, w2, b2, g2, be2, w3, b3) = params
    x = x_nchw.reshape(x_nchw.shape[0], -1)

    def bn(h, g, be):
        mu = jnp.mean(h, axis=0, keepdims=True)
        var = jnp.mean((h - mu) ** 2, axis=0, keepdims=True)
        return g * (h - mu) / jnp.sqrt(var + EPS) + be

    h = bn(jax.nn.relu(x @ w1 + b1), g1, be1)
    h = bn(jax.nn.relu(h @ w2 + b2), g2, be2)
    return h @ w3 + b3


if __name__ == "__main__":
    key = jax.random.PRNGKey(0)
    kx, kp = jax.random.split(key)

    n_classes = 10
    params = init_params(kp, n_classes)

    # Case 1: small batch, single tile (with batch padding/masking).
    x1 = jax.random.normal(kx, (8, 1, 28, 28), jnp.float32)     # NCHW input
    out1 = jax.block_until_ready(flatnet_forward(x1, params))
    assert out1.shape == (8, n_classes)
    assert jnp.allclose(out1, reference_forward_bf16(x1, params),
                        atol=2e-3, rtol=2e-3), "case1 mismatch vs bf16 mirror"
    assert jnp.allclose(out1, reference_forward_f32(x1, params),
                        atol=1e-1, rtol=1e-1), "case1 mismatch vs f32 reference"

    # Case 2: ragged batch across multiple tiles (exercises pipelining + masks).
    x2 = jax.random.normal(jax.random.fold_in(kx, 1), (40, 1, 28, 28), jnp.float32)
    out2 = jax.block_until_ready(flatnet_forward(x2, params, tb_max=16))
    assert out2.shape == (40, n_classes)
    assert jnp.allclose(out2, reference_forward_bf16(x2, params),
                        atol=2e-3, rtol=2e-3), "case2 mismatch vs bf16 mirror"
    assert jnp.allclose(out2, reference_forward_f32(x2, params),
                        atol=1e-1, rtol=1e-1), "case2 mismatch vs f32 reference"

    print("KERNEL_OK")
</pallas_src>

<mosaic_0001>
module attributes {stable_mosaic.version = 11 : i64} {
  func.func @flatnet_kernel(%arg0: i32, %arg1: i32, %arg2: memref<16x784xf32, #tpu.memory_space<vmem>>, %arg3: memref<784x384xbf16, #tpu.memory_space<vmem>>, %arg4: memref<3x384xf32, #tpu.memory_space<vmem>>, %arg5: memref<384x128xbf16, #tpu.memory_space<vmem>>, %arg6: memref<3x128xf32, #tpu.memory_space<vmem>>, %arg7: memref<128x128xbf16, #tpu.memory_space<vmem>>, %arg8: memref<1x128xf32, #tpu.memory_space<vmem>>, %arg9: memref<16x128xf32, #tpu.memory_space<vmem>>, %arg10: memref<16x384xbf16, #tpu.memory_space<vmem>>, %arg11: memref<16x128xbf16, #tpu.memory_space<vmem>>, %arg12: memref<2x384xf32, #tpu.memory_space<vmem>>, %arg13: memref<2x384xf32, #tpu.memory_space<vmem>>, %arg14: memref<2x128xf32, #tpu.memory_space<vmem>>, %arg15: memref<2x128xf32, #tpu.memory_space<vmem>>) attributes {dimension_semantics = [#tpu.dimension_semantics<arbitrary>, #tpu.dimension_semantics<arbitrary>], iteration_bounds = array<i64: 3, 1>, scalar_prefetch = 0 : i64, scratch_operands = 6 : i64, tpu.core_type = #tpu.core_type<tc>, window_params = [{transform_indices = @transform_0, window_bounds = array<i64: 16, 784>}, {pipeline_mode = #tpu.pipeline_mode<synchronous>, transform_indices = @transform_1, window_bounds = array<i64: 784, 384>}, {pipeline_mode = #tpu.pipeline_mode<synchronous>, transform_indices = @transform_2, window_bounds = array<i64: 3, 384>}, {pipeline_mode = #tpu.pipeline_mode<synchronous>, transform_indices = @transform_3, window_bounds = array<i64: 384, 128>}, {pipeline_mode = #tpu.pipeline_mode<synchronous>, transform_indices = @transform_4, window_bounds = array<i64: 3, 128>}, {pipeline_mode = #tpu.pipeline_mode<synchronous>, transform_indices = @transform_5, window_bounds = array<i64: 128, 128>}, {pipeline_mode = #tpu.pipeline_mode<synchronous>, transform_indices = @transform_6, window_bounds = array<i64: 1, 128>}, {transform_indices = @transform_7, window_bounds = array<i64: 16, 128>}]} {
    %c16_i32 = arith.constant 16 : i32
    %0 = arith.muli %arg1, %c16_i32 : i32
    %1 = tpu.assume_multiple %0, 16 : i32
    %c0_i32 = arith.constant 0 : i32
    %2 = arith.cmpi eq, %arg0, %c0_i32 : i32
    %3 = arith.extui %2 : i1 to i32
    %c0_i32_0 = arith.constant 0 : i32
    %4 = arith.cmpi ne, %3, %c0_i32_0 : i32
    scf.if %4 {
      %c0_i32_3 = arith.constant 0 : i32
      %11 = arith.cmpi eq, %arg1, %c0_i32_3 : i32
      %12 = arith.extui %11 : i1 to i32
      %c0_i32_4 = arith.constant 0 : i32
      %13 = arith.cmpi ne, %12, %c0_i32_4 : i32
      scf.if %13 {
        %cst_23 = arith.constant 0.000000e+00 : f32
        %48 = vector.broadcast %cst_23 : f32 to vector<2x384xf32>
        %c0_24 = arith.constant 0 : index
        %c0_25 = arith.constant 0 : index
        %49 = vector.load %arg12[%c0_24, %c0_25] : memref<2x384xf32, #tpu.memory_space<vmem>>, vector<2x384xf32>
        tpu.vector_store %arg12[%c0_24, %c0_25], %48 {strides = array<i32>} : memref<2x384xf32, #tpu.memory_space<vmem>>, vector<2x384xf32>,
        %cst_26 = arith.constant 0.000000e+00 : f32
        %50 = vector.broadcast %cst_26 : f32 to vector<2x128xf32>
        %c0_27 = arith.constant 0 : index
        %c0_28 = arith.constant 0 : index
        %51 = vector.load %arg14[%c0_27, %c0_28] : memref<2x128xf32, #tpu.memory_space<vmem>>, vector<2x128xf32>
        tpu.vector_store %arg14[%c0_27, %c0_28], %50 {strides = array<i32>} : memref<2x128xf32, #tpu.memory_space<vmem>>, vector<2x128xf32>,
      } else {
      }
      %c0 = arith.constant 0 : index
      %c0_5 = arith.constant 0 : index
      %14 = vector.load %arg2[%c0, %c0_5] : memref<16x784xf32, #tpu.memory_space<vmem>>, vector<16x784xf32>
      %15 = arith.truncf %14 : vector<16x784xf32> to vector<16x784xbf16>
      %c0_6 = arith.constant 0 : index
      %c0_7 = arith.constant 0 : index
      %16 = vector.load %arg3[%c0_6, %c0_7] : memref<784x384xbf16, #tpu.memory_space<vmem>>, vector<784x384xbf16>
      %cst = arith.constant dense<0.000000e+00> : vector<16x384xf32>
      %17 = tpu.matmul %15, %16, %cst {dimension_numbers = #tpu.dot_dimension_numbers<[1], [0], [0], [1], [0, 0, 1, 1], [], []>} : vector<16x784xbf16>, vector<784x384xbf16>, vector<16x384xf32> -> vector<16x384xf32>
      %c0_8 = arith.constant 0 : index
      %c0_9 = arith.constant 0 : index
      %18 = vector.load %arg4[%c0_8, %c0_9] : memref<3x384xf32, #tpu.memory_space<vmem>>, vector<1x384xf32>
      %19 = vector.broadcast %18 : vector<1x384xf32> to vector<16x384xf32>
      %20 = arith.addf %17, %19 : vector<16x384xf32>
      %cst_10 = arith.constant 0.000000e+00 : f32
      %21 = vector.broadcast %cst_10 : f32 to vector<16x384xf32>
      %22 = arith.maximumf %20, %21 : vector<16x384xf32>
      %23 = arith.truncf %22 : vector<16x384xf32> to vector<16x384xbf16>
      %24 = arith.index_cast %1 : i32 to index
      %c0_11 = arith.constant 0 : index
      %25 = vector.load %arg10[%24, %c0_11] : memref<16x384xbf16, #tpu.memory_space<vmem>>, vector<16x384xbf16>
      tpu.vector_store %arg10[%24, %c0_11], %23 {strides = array<i32>} : memref<16x384xbf16, #tpu.memory_space<vmem>>, vector<16x384xbf16>,
      %26 = arith.extf %23 : vector<16x384xbf16> to vector<16x384xf32>
      %27 = tpu.iota {dimensions = array<i32: 0>} : vector<16x1xi32>
      %c16_i32_12 = arith.constant 16 : i32
      %28 = arith.muli %arg1, %c16_i32_12 : i32
      %29 = vector.broadcast %28 : i32 to vector<16x1xi32>
      %30 = arith.addi %27, %29 : vector<16x1xi32>
      %c8_i32 = arith.constant 8 : i32
      %31 = vector.broadcast %c8_i32 : i32 to vector<16x1xi32>
      %32 = arith.cmpi slt, %30, %31 : vector<16x1xi32>
      %cst_13 = arith.constant 0.000000e+00 : f32
      %33 = vector.shape_cast %32 : vector<16x1xi1> to vector<16x1xi1>
      %34 = vector.broadcast %33 : vector<16x1xi1> to vector<16x384xi1>
      %35 = vector.broadcast %cst_13 : f32 to vector<16x384xf32>
      %36 = arith.select %34, %26, %35 : vector<16x384xi1>, vector<16x384xf32>
      %c0_14 = arith.constant 0 : index
      %c0_15 = arith.constant 0 : index
      %37 = vector.load %arg12[%c0_14, %c0_15] : memref<2x384xf32, #tpu.memory_space<vmem>>, vector<1x384xf32>
      %cst_16 = arith.constant dense<0.000000e+00> : vector<384xf32>
      %38 = vector.multi_reduction <add>, %36, %cst_16 [0] : vector<16x384xf32> to vector<384xf32>
      %39 = vector.shape_cast %38 : vector<384xf32> to vector<1x384xf32>
      %40 = arith.addf %37, %39 : vector<1x384xf32>
      %c0_17 = arith.constant 0 : index
      %c0_18 = arith.constant 0 : index
      %41 = vector.load %arg12[%c0_17, %c0_18] : memref<2x384xf32, #tpu.memory_space<vmem>>, vector<1x384xf32>
      tpu.vector_store %arg12[%c0_17, %c0_18], %40 {strides = array<i32>} : memref<2x384xf32, #tpu.memory_space<vmem>>, vector<1x384xf32>,
      %c1 = arith.constant 1 : index
      %c0_19 = arith.constant 0 : index
      %42 = vector.load %arg12[%c1, %c0_19] : memref<2x384xf32, #tpu.memory_space<vmem>>, vector<1x384xf32>
      %43 = arith.mulf %36, %36 : vector<16x384xf32>
      %cst_20 = arith.constant dense<0.000000e+00> : vector<384xf32>
      %44 = vector.multi_reduction <add>, %43, %cst_20 [0] : vector<16x384xf32> to vector<384xf32>
      %45 = vector.shape_cast %44 : vector<384xf32> to vector<1x384xf32>
      %46 = arith.addf %42, %45 : vector<1x384xf32>
      %c1_21 = arith.constant 1 : index
      %c0_22 = arith.constant 0 : index
      %47 = vector.load %arg12[%c1_21, %c0_22] : memref<2x384xf32, #tpu.memory_space<vmem>>, vector<1x384xf32>
      tpu.vector_store %arg12[%c1_21, %c0_22], %46 {strides = array<i32>} : memref<2x384xf32, #tpu.memory_space<vmem>>, vector<1x384xf32>,
    } else {
    }
    %c1_i32 = arith.constant 1 : i32
    %5 = arith.cmpi eq, %arg0, %c1_i32 : i32
    %6 = arith.extui %5 : i1 to i32
    %c0_i32_1 = arith.constant 0 : i32
    %7 = arith.cmpi ne, %6, %c0_i32_1 : i32
    scf.if %7 {
      %c0_i32_3 = arith.constant 0 : i32
      %11 = arith.cmpi eq, %arg1, %c0_i32_3 : i32
      %12 = arith.extui %11 : i1 to i32
      %c0_i32_4 = arith.constant 0 : i32
      %13 = arith.cmpi ne, %12, %c0_i32_4 : i32
      scf.if %13 {
        %c0_26 = arith.constant 0 : index
        %c0_27 = arith.constant 0 : index
        %56 = vector.load %arg12[%c0_26, %c0_27] : memref<2x384xf32, #tpu.memory_space<vmem>>, vector<1x384xf32>
        %cst_28 = arith.constant 1.250000e-01 : f32
        %57 = vector.broadcast %cst_28 : f32 to vector<1x384xf32>
        %58 = arith.mulf %56, %57 : vector<1x384xf32>
        %c1_29 = arith.constant 1 : index
        %c0_30 = arith.constant 0 : index
        %59 = vector.load %arg12[%c1_29, %c0_30] : memref<2x384xf32, #tpu.memory_space<vmem>>, vector<1x384xf32>
        %cst_31 = arith.constant 1.250000e-01 : f32
        %60 = vector.broadcast %cst_31 : f32 to vector<1x384xf32>
        %61 = arith.mulf %59, %60 : vector<1x384xf32>
        %62 = arith.mulf %58, %58 : vector<1x384xf32>
        %63 = arith.subf %61, %62 : vector<1x384xf32>
        %cst_32 = arith.constant 0.000000e+00 : f32
        %64 = vector.broadcast %cst_32 : f32 to vector<1x384xf32>
        %65 = arith.maximumf %63, %64 : vector<1x384xf32>
        %c1_33 = arith.constant 1 : index
        %c0_34 = arith.constant 0 : index
        %66 = vector.load %arg4[%c1_33, %c0_34] : memref<3x384xf32, #tpu.memory_space<vmem>>, vector<1x384xf32>
        %cst_35 = arith.constant 9.99999974E-6 : f32
        %67 = vector.broadcast %cst_35 : f32 to vector<1x384xf32>
        %68 = arith.addf %65, %67 : vector<1x384xf32>
        %69 = math.rsqrt %68 : vector<1x384xf32>
        %70 = arith.mulf %66, %69 : vector<1x384xf32>
        %c0_36 = arith.constant 0 : index
        %c0_37 = arith.constant 0 : index
        %71 = vector.load %arg13[%c0_36, %c0_37] : memref<2x384xf32, #tpu.memory_space<vmem>>, vector<1x384xf32>
        tpu.vector_store %arg13[%c0_36, %c0_37], %70 {strides = array<i32>} : memref<2x384xf32, #tpu.memory_space<vmem>>, vector<1x384xf32>,
        %c2 = arith.constant 2 : index
        %c0_38 = arith.constant 0 : index
        %72 = vector.load %arg4[%c2, %c0_38] : memref<3x384xf32, #tpu.memory_space<vmem>>, vector<1x384xf32>
        %73 = arith.mulf %58, %70 : vector<1x384xf32>
        %74 = arith.subf %72, %73 : vector<1x384xf32>
        %c1_39 = arith.constant 1 : index
        %c0_40 = arith.constant 0 : index
        %75 = vector.load %arg13[%c1_39, %c0_40] : memref<2x384xf32, #tpu.memory_space<vmem>>, vector<1x384xf32>
        tpu.vector_store %arg13[%c1_39, %c0_40], %74 {strides = array<i32>} : memref<2x384xf32, #tpu.memory_space<vmem>>, vector<1x384xf32>,
      } else {
      }
      %14 = arith.index_cast %1 : i32 to index
      %c0 = arith.constant 0 : index
      %15 = vector.load %arg10[%14, %c0] : memref<16x384xbf16, #tpu.memory_space<vmem>>, vector<16x384xbf16>
      %16 = arith.extf %15 : vector<16x384xbf16> to vector<16x384xf32>
      %c0_5 = arith.constant 0 : index
      %c0_6 = arith.constant 0 : index
      %17 = vector.load %arg13[%c0_5, %c0_6] : memref<2x384xf32, #tpu.memory_space<vmem>>, vector<1x384xf32>
      %18 = vector.broadcast %17 : vector<1x384xf32> to vector<16x384xf32>
      %19 = arith.mulf %16, %18 : vector<16x384xf32>
      %c1 = arith.constant 1 : index
      %c0_7 = arith.constant 0 : index
      %20 = vector.load %arg13[%c1, %c0_7] : memref<2x384xf32, #tpu.memory_space<vmem>>, vector<1x384xf32>
      %21 = vector.broadcast %20 : vector<1x384xf32> to vector<16x384xf32>
      %22 = arith.addf %19, %21 : vector<16x384xf32>
      %23 = arith.truncf %22 : vector<16x384xf32> to vector<16x384xbf16>
      %c0_8 = arith.constant 0 : index
      %c0_9 = arith.constant 0 : index
      %24 = vector.load %arg5[%c0_8, %c0_9] : memref<384x128xbf16, #tpu.memory_space<vmem>>, vector<384x128xbf16>
      %cst = arith.constant dense<0.000000e+00> : vector<16x128xf32>
      %25 = tpu.matmul %23, %24, %cst {dimension_numbers = #tpu.dot_dimension_numbers<[1], [0], [0], [1], [0, 0, 1, 1], [], []>} : vector<16x384xbf16>, vector<384x128xbf16>, vector<16x128xf32> -> vector<16x128xf32>
      %c0_10 = arith.constant 0 : index
      %c0_11 = arith.constant 0 : index
      %26 = vector.load %arg6[%c0_10, %c0_11] : memref<3x128xf32, #tpu.memory_space<vmem>>, vector<1x128xf32>
      %27 = vector.broadcast %26 : vector<1x128xf32> to vector<16x128xf32>
      %28 = arith.addf %25, %27 : vector<16x128xf32>
      %cst_12 = arith.constant 0.000000e+00 : f32
      %29 = vector.broadcast %cst_12 : f32 to vector<16x128xf32>
      %30 = arith.maximumf %28, %29 : vector<16x128xf32>
      %31 = arith.truncf %30 : vector<16x128xf32> to vector<16x128xbf16>
      %32 = arith.index_cast %1 : i32 to index
      %c0_13 = arith.constant 0 : index
      %33 = vector.load %arg11[%32, %c0_13] : memref<16x128xbf16, #tpu.memory_space<vmem>>, vector<16x128xbf16>
      tpu.vector_store %arg11[%32, %c0_13], %31 {strides = array<i32>} : memref<16x128xbf16, #tpu.memory_space<vmem>>, vector<16x128xbf16>,
      %34 = arith.extf %31 : vector<16x128xbf16> to vector<16x128xf32>
      %35 = tpu.iota {dimensions = array<i32: 0>} : vector<16x1xi32>
      %c16_i32_14 = arith.constant 16 : i32
      %36 = arith.muli %arg1, %c16_i32_14 : i32
      %37 = vector.broadcast %36 : i32 to vector<16x1xi32>
      %38 = arith.addi %35, %37 : vector<16x1xi32>
      %c8_i32 = arith.constant 8 : i32
      %39 = vector.broadcast %c8_i32 : i32 to vector<16x1xi32>
      %40 = arith.cmpi slt, %38, %39 : vector<16x1xi32>
      %cst_15 = arith.constant 0.000000e+00 : f32
      %41 = vector.shape_cast %40 : vector<16x1xi1> to vector<16x1xi1>
      %42 = vector.broadcast %41 : vector<16x1xi1> to vector<16x128xi1>
      %43 = vector.broadcast %cst_15 : f32 to vector<16x128xf32>
      %44 = arith.select %42, %34, %43 : vector<16x128xi1>, vector<16x128xf32>
      %c0_16 = arith.constant 0 : index
      %c0_17 = arith.constant 0 : index
      %45 = vector.load %arg14[%c0_16, %c0_17] : memref<2x128xf32, #tpu.memory_space<vmem>>, vector<1x128xf32>
      %cst_18 = arith.constant dense<0.000000e+00> : vector<128xf32>
      %46 = vector.multi_reduction <add>, %44, %cst_18 [0] : vector<16x128xf32> to vector<128xf32>
      %47 = vector.shape_cast %46 : vector<128xf32> to vector<1x128xf32>
      %48 = arith.addf %45, %47 : vector<1x128xf32>
      %c0_19 = arith.constant 0 : index
      %c0_20 = arith.constant 0 : index
      %49 = vector.load %arg14[%c0_19, %c0_20] : memref<2x128xf32, #tpu.memory_space<vmem>>, vector<1x128xf32>
      tpu.vector_store %arg14[%c0_19, %c0_20], %48 {strides = array<i32>} : memref<2x128xf32, #tpu.memory_space<vmem>>, vector<1x128xf32>,
      %c1_21 = arith.constant 1 : index
      %c0_22 = arith.constant 0 : index
      %50 = vector.load %arg14[%c1_21, %c0_22] : memref<2x128xf32, #tpu.memory_space<vmem>>, vector<1x128xf32>
      %51 = arith.mulf %44, %44 : vector<16x128xf32>
      %cst_23 = arith.constant dense<0.000000e+00> : vector<128xf32>
      %52 = vector.multi_reduction <add>, %51, %cst_23 [0] : vector<16x128xf32> to vector<128xf32>
      %53 = vector.shape_cast %52 : vector<128xf32> to vector<1x128xf32>
      %54 = arith.addf %50, %53 : vector<1x128xf32>
      %c1_24 = arith.constant 1 : index
      %c0_25 = arith.constant 0 : index
      %55 = vector.load %arg14[%c1_24, %c0_25] : memref<2x128xf32, #tpu.memory_space<vmem>>, vector<1x128xf32>
      tpu.vector_store %arg14[%c1_24, %c0_25], %54 {strides = array<i32>} : memref<2x128xf32, #tpu.memory_space<vmem>>, vector<1x128xf32>,
    } else {
    }
    %c2_i32 = arith.constant 2 : i32
    %8 = arith.cmpi eq, %arg0, %c2_i32 : i32
    %9 = arith.extui %8 : i1 to i32
    %c0_i32_2 = arith.constant 0 : i32
    %10 = arith.cmpi ne, %9, %c0_i32_2 : i32
    scf.if %10 {
      %c0_i32_3 = arith.constant 0 : i32
      %11 = arith.cmpi eq, %arg1, %c0_i32_3 : i32
      %12 = arith.extui %11 : i1 to i32
      %c0_i32_4 = arith.constant 0 : i32
      %13 = arith.cmpi ne, %12, %c0_i32_4 : i32
      scf.if %13 {
        %c0_14 = arith.constant 0 : index
        %c0_15 = arith.constant 0 : index
        %30 = vector.load %arg14[%c0_14, %c0_15] : memref<2x128xf32, #tpu.memory_space<vmem>>, vector<1x128xf32>
        %cst_16 = arith.constant 1.250000e-01 : f32
        %31 = vector.broadcast %cst_16 : f32 to vector<1x128xf32>
        %32 = arith.mulf %30, %31 : vector<1x128xf32>
        %c1_17 = arith.constant 1 : index
        %c0_18 = arith.constant 0 : index
        %33 = vector.load %arg14[%c1_17, %c0_18] : memref<2x128xf32, #tpu.memory_space<vmem>>, vector<1x128xf32>
        %cst_19 = arith.constant 1.250000e-01 : f32
        %34 = vector.broadcast %cst_19 : f32 to vector<1x128xf32>
        %35 = arith.mulf %33, %34 : vector<1x128xf32>
        %36 = arith.mulf %32, %32 : vector<1x128xf32>
        %37 = arith.subf %35, %36 : vector<1x128xf32>
        %cst_20 = arith.constant 0.000000e+00 : f32
        %38 = vector.broadcast %cst_20 : f32 to vector<1x128xf32>
        %39 = arith.maximumf %37, %38 : vector<1x128xf32>
        %c1_21 = arith.constant 1 : index
        %c0_22 = arith.constant 0 : index
        %40 = vector.load %arg6[%c1_21, %c0_22] : memref<3x128xf32, #tpu.memory_space<vmem>>, vector<1x128xf32>
        %cst_23 = arith.constant 9.99999974E-6 : f32
        %41 = vector.broadcast %cst_23 : f32 to vector<1x128xf32>
        %42 = arith.addf %39, %41 : vector<1x128xf32>
        %43 = math.rsqrt %42 : vector<1x128xf32>
        %44 = arith.mulf %40, %43 : vector<1x128xf32>
        %c0_24 = arith.constant 0 : index
        %c0_25 = arith.constant 0 : index
        %45 = vector.load %arg15[%c0_24, %c0_25] : memref<2x128xf32, #tpu.memory_space<vmem>>, vector<1x128xf32>
        tpu.vector_store %arg15[%c0_24, %c0_25], %44 {strides = array<i32>} : memref<2x128xf32, #tpu.memory_space<vmem>>, vector<1x128xf32>,
        %c2 = arith.constant 2 : index
        %c0_26 = arith.constant 0 : index
        %46 = vector.load %arg6[%c2, %c0_26] : memref<3x128xf32, #tpu.memory_space<vmem>>, vector<1x128xf32>
        %47 = arith.mulf %32, %44 : vector<1x128xf32>
        %48 = arith.subf %46, %47 : vector<1x128xf32>
        %c1_27 = arith.constant 1 : index
        %c0_28 = arith.constant 0 : index
        %49 = vector.load %arg15[%c1_27, %c0_28] : memref<2x128xf32, #tpu.memory_space<vmem>>, vector<1x128xf32>
        tpu.vector_store %arg15[%c1_27, %c0_28], %48 {strides = array<i32>} : memref<2x128xf32, #tpu.memory_space<vmem>>, vector<1x128xf32>,
      } else {
      }
      %14 = arith.index_cast %1 : i32 to index
      %c0 = arith.constant 0 : index
      %15 = vector.load %arg11[%14, %c0] : memref<16x128xbf16, #tpu.memory_space<vmem>>, vector<16x128xbf16>
      %16 = arith.extf %15 : vector<16x128xbf16> to vector<16x128xf32>
      %c0_5 = arith.constant 0 : index
      %c0_6 = arith.constant 0 : index
      %17 = vector.load %arg15[%c0_5, %c0_6] : memref<2x128xf32, #tpu.memory_space<vmem>>, vector<1x128xf32>
      %18 = vector.broadcast %17 : vector<1x128xf32> to vector<16x128xf32>
      %19 = arith.mulf %16, %18 : vector<16x128xf32>
      %c1 = arith.constant 1 : index
      %c0_7 = arith.constant 0 : index
      %20 = vector.load %arg15[%c1, %c0_7] : memref<2x128xf32, #tpu.memory_space<vmem>>, vector<1x128xf32>
      %21 = vector.broadcast %20 : vector<1x128xf32> to vector<16x128xf32>
      %22 = arith.addf %19, %21 : vector<16x128xf32>
      %23 = arith.truncf %22 : vector<16x128xf32> to vector<16x128xbf16>
      %c0_8 = arith.constant 0 : index
      %c0_9 = arith.constant 0 : index
      %24 = vector.load %arg7[%c0_8, %c0_9] : memref<128x128xbf16, #tpu.memory_space<vmem>>, vector<128x128xbf16>
      %cst = arith.constant dense<0.000000e+00> : vector<16x128xf32>
      %25 = tpu.matmul %23, %24, %cst {dimension_numbers = #tpu.dot_dimension_numbers<[1], [0], [0], [1], [0, 0, 1, 1], [], []>} : vector<16x128xbf16>, vector<128x128xbf16>, vector<16x128xf32> -> vector<16x128xf32>
      %c0_10 = arith.constant 0 : index
      %c0_11 = arith.constant 0 : index
      %26 = vector.load %arg8[%c0_10, %c0_11] : memref<1x128xf32, #tpu.memory_space<vmem>>, vector<1x128xf32>
      %27 = vector.broadcast %26 : vector<1x128xf32> to vector<16x128xf32>
      %28 = arith.addf %25, %27 : vector<16x128xf32>
      %c0_12 = arith.constant 0 : index
      %c0_13 = arith.constant 0 : index
      %29 = vector.load %arg9[%c0_12, %c0_13] : memref<16x128xf32, #tpu.memory_space<vmem>>, vector<16x128xf32>
      tpu.vector_store %arg9[%c0_12, %c0_13], %28 {strides = array<i32>} : memref<16x128xf32, #tpu.memory_space<vmem>>, vector<16x128xf32>,
    } else {
    }
    return
  }
  func.func @transform_0(%arg0: i32, %arg1: i32) -> (i32, i32) {
    %c0_i32 = arith.constant 0 : i32
    %0 = arith.cmpi eq, %arg0, %c0_i32 : i32
    %c0_i32_0 = arith.constant 0 : i32
    %1 = arith.select %0, %arg1, %c0_i32_0 : i32
    %c0_i32_1 = arith.constant 0 : i32
    %c0_i32_2 = arith.constant 0 : i32
    return %1, %c0_i32_1 : i32, i32
  }
  func.func @transform_1(%arg0: i32, %arg1: i32) -> (i32, i32) {
    %c0_i32 = arith.constant 0 : i32
    %c0_i32_0 = arith.constant 0 : i32
    %c0_i32_1 = arith.constant 0 : i32
    return %c0_i32, %c0_i32_0 : i32, i32
  }
  func.func @transform_2(%arg0: i32, %arg1: i32) -> (i32, i32) {
    %c0_i32 = arith.constant 0 : i32
    %c0_i32_0 = arith.constant 0 : i32
    %c0_i32_1 = arith.constant 0 : i32
    return %c0_i32, %c0_i32_0 : i32, i32
  }
  func.func @transform_3(%arg0: i32, %arg1: i32) -> (i32, i32) {
    %c0_i32 = arith.constant 0 : i32
    %c0_i32_0 = arith.constant 0 : i32
    %c0_i32_1 = arith.constant 0 : i32
    return %c0_i32, %c0_i32_0 : i32, i32
  }
  func.func @transform_4(%arg0: i32, %arg1: i32) -> (i32, i32) {
    %c0_i32 = arith.constant 0 : i32
    %c0_i32_0 = arith.constant 0 : i32
    %c0_i32_1 = arith.constant 0 : i32
    return %c0_i32, %c0_i32_0 : i32, i32
  }
  func.func @transform_5(%arg0: i32, %arg1: i32) -> (i32, i32) {
    %c0_i32 = arith.constant 0 : i32
    %c0_i32_0 = arith.constant 0 : i32
    %c0_i32_1 = arith.constant 0 : i32
    return %c0_i32, %c0_i32_0 : i32, i32
  }
  func.func @transform_6(%arg0: i32, %arg1: i32) -> (i32, i32) {
    %c0_i32 = arith.constant 0 : i32
    %c0_i32_0 = arith.constant 0 : i32
    %c0_i32_1 = arith.constant 0 : i32
    return %c0_i32, %c0_i32_0 : i32, i32
  }
  func.func @transform_7(%arg0: i32, %arg1: i32) -> (i32, i32) {
    %c2_i32 = arith.constant 2 : i32
    %0 = arith.cmpi eq, %arg0, %c2_i32 : i32
    %c0_i32 = arith.constant 0 : i32
    %1 = arith.select %0, %arg1, %c0_i32 : i32
    %c0_i32_0 = arith.constant 0 : i32
    %c0_i32_1 = arith.constant 0 : i32
    return %1, %c0_i32_0 : i32, i32
  }
}

</mosaic_0001>

<llo_original>
// kernel: tpu_custom_call.1
$region0: #{tpu_custom_call.1}
  #allocation0 [shape = 'u32[]', space=smem, size = 0x4, offset = 0x4, fixed_abs, tag = 'smem constant byte address 0x4 - core index']
  #allocation1 [shape = 'u32[72,128]{1,0:T(1,128)}', space=vmem, size = 0x9000, scoped, tag = 'internal scratch']
  #allocation2 [shape = 'bf16[16,384]{1,0:T(8,128)(2,1)}', space=vmem, size = 0x3000, scoped, tag = 'scratch operand']
  #allocation3 [shape = 'bf16[16,128]{1,0:T(8,128)(2,1)}', space=vmem, size = 0x1000, scoped, tag = 'scratch operand']
  #allocation4 [shape = 'f32[2,384]{1,0:T(2,128)}', space=vmem, size = 0xc00, scoped, tag = 'scratch operand']
  #allocation5 [shape = 'f32[2,384]{1,0:T(2,128)}', space=vmem, size = 0xc00, scoped, tag = 'scratch operand']
  #allocation6 [shape = 'f32[2,128]{1,0:T(2,128)}', space=vmem, size = 0x400, scoped, tag = 'scratch operand']
  #allocation7 [shape = 'f32[2,128]{1,0:T(2,128)}', space=vmem, size = 0x400, scoped, tag = 'scratch operand']
  %s0 = inlined_call_operand.hbm [shape: f32[16,784], index: 0, kind: input, shape index: {}]
  %s1 = inlined_call_operand.hbm [shape: bf16[784,384], index: 1, kind: input, shape index: {}]
  %s2 = inlined_call_operand.hbm [shape: f32[3,384], index: 2, kind: input, shape index: {}]
  %s3 = inlined_call_operand.hbm [shape: bf16[384,128], index: 3, kind: input, shape index: {}]
  %s4 = inlined_call_operand.hbm [shape: f32[3,128], index: 4, kind: input, shape index: {}]
  %s5 = inlined_call_operand.hbm [shape: bf16[128,128], index: 5, kind: input, shape index: {}]
  %s6 = inlined_call_operand.vmem [shape: f32[1,128], index: 6, kind: input, shape index: {}]
  %s7 = inlined_call_operand.hbm [shape: f32[16,128], index: 7, kind: output, shape index: {}]
  %s8 = sld [smem:[#allocation0]]
  $region109: #{tpu_custom_call.1} parent=0
    _
  %s10 = ssub.s32 1, %s8
  %s11 = scalar_select 0, %s10, %s8
  $region1: #{tpu_custom_call.1} parent=0
    #allocation8 [shape = 'u8[114688]{0}', space=vmem, size = 0x1c000, scoped, tag = 'input window, operand 0']
    #allocation9 [shape = 's32[2]{0}', space=sflag, size = 0x8, scoped, tag = 'scoped memory for tpu_custom_call.1']
    #allocation10 [shape = 's32[2]{0}', space=sflag, size = 0x8, scoped, tag = 'scoped memory for tpu_custom_call.1']
    #allocation11 [shape = 'u8[602112]{0}', space=vmem, size = 0x93000, scoped, tag = 'input window, operand 1, single buffered']
    #allocation12 [shape = 's32[1]{0}', space=sflag, size = 0x4, scoped, tag = 'scoped memory for tpu_custom_call.1']
    #allocation13 [shape = 'u8[6144]{0}', space=vmem, size = 0x1800, scoped, tag = 'input window, operand 2, single buffered']
    #allocation14 [shape = 'u8[98304]{0}', space=vmem, size = 0x18000, scoped, tag = 'input window, operand 3, single buffered']
    #allocation15 [shape = 's32[1]{0}', space=sflag, size = 0x4, scoped, tag = 'scoped memory for tpu_custom_call.1']
    #allocation16 [shape = 'u8[2048]{0}', space=vmem, size = 0x800, scoped, tag = 'input window, operand 4, single buffered']
    #allocation17 [shape = 'u8[32768]{0}', space=vmem, size = 0x8000, scoped, tag = 'input window, operand 5, single buffered']
    #allocation18 [shape = 's32[1]{0}', space=sflag, size = 0x4, scoped, tag = 'scoped memory for tpu_custom_call.1']
    #allocation19 [shape = 'u8[16384]{0}', space=vmem, size = 0x4000, scoped, tag = 'output window, operand 0']
    %12 = vsyncpa [#allocation9], 0
    %s13 = scalar_lea.sflag [#allocation9], 1
    %14 = vsyncpa %s13, 0
    %15 = vsyncpa [#allocation12], 0
    %16 = vsyncpa [#allocation15], 0
    %17 = vsyncpa [#allocation18], 0
    %18 = vsyncpa [#allocation10], 0
    %s19 = scalar_lea.sflag [#allocation10], 1
    %20 = vsyncpa %s19, 0
    loop: start=0, step=1, limit=5
    $region2: #{tpu_custom_call.1} parent=1 // loop_pre_header
      _
    $region3: #{tpu_custom_call.1} parent=1 // loop_header
      %s22 = sphi 0, %s26
      %p23 = scmp.ge.s32.totalorder %s22, 5
      %s29 = sphi 0, %s41
      %s30 = sphi 0, %s37
      %s31 = sphi 0, %s29
      %s32 = sphi 0, %s30
      %s33 = sphi 0, %s31
      %s34 = sphi 0, %s32
      %s48 = sphi 0, %s50
      %s51 = sphi 0, %s48
      %s52 = sphi 0, %s51
      %s68 = sphi 0, %s52
      %s72 = sphi 0, %s72
      %s74 = sphi 0, %s72
      %s75 = sphi 0, %s74
      %s89 = sphi 0, %s75
      %s93 = sphi 0, %s93
      %s95 = sphi 0, %s93
      %s96 = sphi 0, %s95
      %s110 = sphi 0, %s96
      %s114 = sphi 0, %s114
      %s116 = sphi 0, %s114
      %s117 = sphi 0, %s116
      %s131 = sphi 0, %s117
      %s135 = sphi 0, %s135
      %s137 = sphi 0, %s135
      %s138 = sphi 0, %s137
      %s152 = sphi 0, %s138
      %s156 = sphi 0, %s156
      %s158 = sphi 0, %s156
      %s159 = sphi 0, %s158
      %s173 = sphi 0, %s159
      %s177 = sphi 0, %s177
      %s179 = sphi 0, %s177
      %s180 = sphi 0, %s179
      %s194 = sphi 0, %s180
      %s204 = sphi 0, %s206
      %s207 = sphi 0, %s204
      %s208 = sphi 0, %s207
      %s224 = sphi 0, %s208
    $region4: #{tpu_custom_call.1} parent=1 // loop_header_branch
      %25 = sbr.rel (%p23) target = $region8
    $region5: #{tpu_custom_call.1} parent=1 // loop_body
      %s27 = ssub.s32 %s22, 1
      %s28 = ssub.s32 %s22, 2
      %s35 = sadd.s32 1, %s30
      %p36 = scmp.ge.s32.totalorder %s35, 1
      %s37 = scalar_select %p36, 0, %s35
      %s38 = sadd.s32 1, %s29
      %s39 = scalar_select %p36, %s38, %s29
      %p40 = scmp.ge.s32.totalorder %s39, 3
      %s41 = scalar_select %p40, 0, %s39
      %p42 = scmp.eq.s32.totalorder %s29, 0
      %s43 = scalar_select %p42, %s30, 0
      %p44 = scmp.eq.s32.totalorder %s41, 0
      %s45 = scalar_select %p44, %s37, 0
      %s46 = ssub.s32 %s43, %s45
      %p47 = scmp.eq.s32.totalorder %s46, 0
      %s49 = sadd.s32 %s48, 1
      %s50 = scalar_select %p47, %s48, %s49
      %p53 = pneg %p47
      %p54 = scmp.eq.s32.totalorder %s22, 2
      %p55 = por %p53, %p54
      %p56 = scmp.ne.s32.totalorder %s48, %s51
      %p57 = scmp.eq.s32.totalorder %s22, 0
      %p58 = por %p56, %p57
      %p59 = scmp.ne.s32.totalorder %s48, %s51
      %p60 = scmp.eq.s32.totalorder %s27, 2
      %p61 = por %p59, %p60
      %p62 = scmp.ne.s32.totalorder %s51, %s52
      %p63 = scmp.eq.s32.totalorder %s27, 0
      %p64 = por %p62, %p63
      %p65 = scmp.ne.s32.totalorder %s51, %s52
      %p66 = scmp.eq.s32.totalorder %s28, 2
      %p67 = por %p65, %p66
      %p69 = scmp.ne.s32.totalorder %s52, %s68
      %p70 = scmp.eq.s32.totalorder %s28, 0
      %p71 = por %p69, %p70
      %s73 = sadd.s32 %s72, 1
      %p76 = scmp.eq.s32.totalorder %s22, 2
      %p77 = scmp.ne.s32.totalorder %s72, %s74
      %p78 = scmp.eq.s32.totalorder %s22, 0
      %p79 = por %p77, %p78
      %p80 = scmp.ne.s32.totalorder %s72, %s74
      %p81 = scmp.eq.s32.totalorder %s27, 2
      %p82 = por %p80, %p81
      %p83 = scmp.ne.s32.totalorder %s74, %s75
      %p84 = scmp.eq.s32.totalorder %s27, 0
      %p85 = por %p83, %p84
      %p86 = scmp.ne.s32.totalorder %s74, %s75
      %p87 = scmp.eq.s32.totalorder %s28, 2
      %p88 = por %p86, %p87
      %p90 = scmp.ne.s32.totalorder %s75, %s89
      %p91 = scmp.eq.s32.totalorder %s28, 0
      %p92 = por %p90, %p91
      %s94 = sadd.s32 %s93, 1
      %p97 = scmp.eq.s32.totalorder %s22, 2
      %p98 = scmp.ne.s32.totalorder %s93, %s95
      %p99 = scmp.eq.s32.totalorder %s22, 0
      %p100 = por %p98, %p99
      %p101 = scmp.ne.s32.totalorder %s93, %s95
      %p102 = scmp.eq.s32.totalorder %s27, 2
      %p103 = por %p101, %p102
      %p104 = scmp.ne.s32.totalorder %s95, %s96
      %p105 = scmp.eq.s32.totalorder %s27, 0
      %p106 = por %p104, %p105
      %p107 = scmp.ne.s32.totalorder %s95, %s96
      %p108 = scmp.eq.s32.totalorder %s28, 2
      %p109 = por %p107, %p108
      %p111 = scmp.ne.s32.totalorder %s96, %s110
      %p112 = scmp.eq.s32.totalorder %s28, 0
      %p113 = por %p111, %p112
      %s115 = sadd.s32 %s114, 1
      %p118 = scmp.eq.s32.totalorder %s22, 2
      %p119 = scmp.ne.s32.totalorder %s114, %s116
      %p120 = scmp.eq.s32.totalorder %s22, 0
      %p121 = por %p119, %p120
      %p122 = scmp.ne.s32.totalorder %s114, %s116
      %p123 = scmp.eq.s32.totalorder %s27, 2
      %p124 = por %p122, %p123
      %p125 = scmp.ne.s32.totalorder %s116, %s117
      %p126 = scmp.eq.s32.totalorder %s27, 0
      %p127 = por %p125, %p126
      %p128 = scmp.ne.s32.totalorder %s116, %s117
      %p129 = scmp.eq.s32.totalorder %s28, 2
      %p130 = por %p128, %p129
      %p132 = scmp.ne.s32.totalorder %s117, %s131
      %p133 = scmp.eq.s32.totalorder %s28, 0
      %p134 = por %p132, %p133
      %s136 = sadd.s32 %s135, 1
      %p139 = scmp.eq.s32.totalorder %s22, 2
      %p140 = scmp.ne.s32.totalorder %s135, %s137
      %p141 = scmp.eq.s32.totalorder %s22, 0
      %p142 = por %p140, %p141
      %p143 = scmp.ne.s32.totalorder %s135, %s137
      %p144 = scmp.eq.s32.totalorder %s27, 2
      %p145 = por %p143, %p144
      %p146 = scmp.ne.s32.totalorder %s137, %s138
      %p147 = scmp.eq.s32.totalorder %s27, 0
      %p148 = por %p146, %p147
      %p149 = scmp.ne.s32.totalorder %s137, %s138
      %p150 = scmp.eq.s32.totalorder %s28, 2
      %p151 = por %p149, %p150
      %p153 = scmp.ne.s32.totalorder %s138, %s152
      %p154 = scmp.eq.s32.totalorder %s28, 0
      %p155 = por %p153, %p154
      %s157 = sadd.s32 %s156, 1
      %p160 = scmp.eq.s32.totalorder %s22, 2
      %p161 = scmp.ne.s32.totalorder %s156, %s158
      %p162 = scmp.eq.s32.totalorder %s22, 0
      %p163 = por %p161, %p162
      %p164 = scmp.ne.s32.totalorder %s156, %s158
      %p165 = scmp.eq.s32.totalorder %s27, 2
      %p166 = por %p164, %p165
      %p167 = scmp.ne.s32.totalorder %s158, %s159
      %p168 = scmp.eq.s32.totalorder %s27, 0
      %p169 = por %p167, %p168
      %p170 = scmp.ne.s32.totalorder %s158, %s159
      %p171 = scmp.eq.s32.totalorder %s28, 2
      %p172 = por %p170, %p171
      %p174 = scmp.ne.s32.totalorder %s159, %s173
      %p175 = scmp.eq.s32.totalorder %s28, 0
      %p176 = por %p174, %p175
      %s178 = sadd.s32 %s177, 1
      %p181 = scmp.eq.s32.totalorder %s22, 2
      %p182 = scmp.ne.s32.totalorder %s177, %s179
      %p183 = scmp.eq.s32.totalorder %s22, 0
      %p184 = por %p182, %p183
      %p185 = scmp.ne.s32.totalorder %s177, %s179
      %p186 = scmp.eq.s32.totalorder %s27, 2
      %p187 = por %p185, %p186
      %p188 = scmp.ne.s32.totalorder %s179, %s180
      %p189 = scmp.eq.s32.totalorder %s27, 0
      %p190 = por %p188, %p189
      %p191 = scmp.ne.s32.totalorder %s179, %s180
      %p192 = scmp.eq.s32.totalorder %s28, 2
      %p193 = por %p191, %p192
      %p195 = scmp.ne.s32.totalorder %s180, %s194
      %p196 = scmp.eq.s32.totalorder %s28, 0
      %p197 = por %p195, %p196
      %p198 = scmp.eq.s32.totalorder %s29, 2
      %s199 = scalar_select %p198, %s30, 0
      %p200 = scmp.eq.s32.totalorder %s41, 2
      %s201 = scalar_select %p200, %s37, 0
      %s202 = ssub.s32 %s199, %s201
      %p203 = scmp.eq.s32.totalorder %s202, 0
      %s205 = sadd.s32 %s204, 1
      %s206 = scalar_select %p203, %s204, %s205
      %p209 = pneg %p203
      %p210 = scmp.eq.s32.totalorder %s22, 2
      %p211 = por %p209, %p210
      %p212 = scmp.ne.s32.totalorder %s204, %s207
      %p213 = scmp.eq.s32.totalorder %s22, 0
      %p214 = por %p212, %p213
      %p215 = scmp.ne.s32.totalorder %s204, %s207
      %p216 = scmp.eq.s32.totalorder %s27, 2
      %p217 = por %p215, %p216
      %p218 = scmp.ne.s32.totalorder %s207, %s208
      %p219 = scmp.eq.s32.totalorder %s27, 0
      %p220 = por %p218, %p219
      %p221 = scmp.ne.s32.totalorder %s207, %s208
      %p222 = scmp.eq.s32.totalorder %s28, 2
      %p223 = por %p221, %p222
      %p225 = scmp.ne.s32.totalorder %s208, %s224
      %p226 = scmp.eq.s32.totalorder %s28, 0
      %p227 = por %p225, %p226
      %p228 = scmp.le.s32.totalorder 1, %s22
      %p229 = scmp.lt.s32.totalorder %s22, 4
      %p230 = pnand %p228, %p229
      %p231 = pneg %p230
      // Predicated region
      $region9: #{tpu_custom_call.1} parent=5 // pred_check
        _
      $region10: #{tpu_custom_call.1} parent=5 // pred_check_branch
        %233 = sbr.rel (%p230) target = $region12
      $region11: #{tpu_custom_call.1} parent=5 // pred_region
        %s234 = ssub.s32 %s22, 1
        // Predicated region
        $region13: #{tpu_custom_call.1} parent=11 // pred_check
          %p235 = pneg %p85
        $region14: #{tpu_custom_call.1} parent=11 // pred_check_branch
          %237 = sbr.rel (%p235) target = $region16
        $region15: #{tpu_custom_call.1} parent=11 // pred_region
          %239 = vsyncadd [#allocation12], 0
          %s240 = sshll.u32 %s1, 4
          %s241 = int_to_ptr.hbm [resolvable:$true] %s240
          %s242 = sshll.u32 [#allocation11], 4
          %s243 = int_to_ptr.vmem [resolvable:$true] %s242
          %248 = dma.hbm_to_vmem [thread:$0]  %s241, 18816, %s243, [#allocation12], 192, 192, 12
        $region16: #{tpu_custom_call.1} parent=11 // pred_fallthru
          _
        // Predicated region
        $region17: #{tpu_custom_call.1} parent=11 // pred_check
          %p249 = pneg %p106
        $region18: #{tpu_custom_call.1} parent=11 // pred_check_branch
          %251 = sbr.rel (%p249) target = $region20
        $region19: #{tpu_custom_call.1} parent=11 // pred_region
          %253 = vsyncadd [#allocation12], 0
          %s255 = sshll.u32 %s2, 4
          %s256 = int_to_ptr.hbm [resolvable:$true] %s255
          %s257 = sshll.u32 [#allocation13], 4
          %s258 = int_to_ptr.vmem [resolvable:$true] %s257
          %260 = dma.hbm_to_vmem [thread:$0]  %s256, 192, %s258, [#allocation12]
        $region20: #{tpu_custom_call.1} parent=11 // pred_fallthru
          _
        // Predicated region
        $region21: #{tpu_custom_call.1} parent=11 // pred_check
          %p261 = pneg %p127
        $region22: #{tpu_custom_call.1} parent=11 // pred_check_branch
          %263 = sbr.rel (%p261) target = $region24
        $region23: #{tpu_custom_call.1} parent=11 // pred_region
          %265 = vsyncadd [#allocation15], 0
          %s266 = sshll.u32 %s3, 4
          %s267 = int_to_ptr.hbm [resolvable:$true] %s266
          %s268 = sshll.u32 [#allocation14], 4
          %s269 = int_to_ptr.vmem [resolvable:$true] %s268
          %274 = dma.hbm_to_vmem [thread:$0]  %s267, 3072, %s269, [#allocation15], 64, 64, 4
        $region24: #{tpu_custom_call.1} parent=11 // pred_fallthru
          _
        // Predicated region
        $region25: #{tpu_custom_call.1} parent=11 // pred_check
          %p275 = pneg %p148
        $region26: #{tpu_custom_call.1} parent=11 // pred_check_branch
          %277 = sbr.rel (%p275) target = $region28
        $region27: #{tpu_custom_call.1} parent=11 // pred_region
          %279 = vsyncadd [#allocation15], 0
          %s281 = sshll.u32 %s4, 4
          %s282 = int_to_ptr.hbm [resolvable:$true] %s281
          %s283 = sshll.u32 [#allocation16], 4
          %s284 = int_to_ptr.vmem [resolvable:$true] %s283
          %286 = dma.hbm_to_vmem [thread:$0]  %s282, 64, %s284, [#allocation15]
        $region28: #{tpu_custom_call.1} parent=11 // pred_fallthru
          _
        // Predicated region
        $region29: #{tpu_custom_call.1} parent=11 // pred_check
          %p287 = pneg %p169
        $region30: #{tpu_custom_call.1} parent=11 // pred_check_branch
          %289 = sbr.rel (%p287) target = $region32
        $region31: #{tpu_custom_call.1} parent=11 // pred_region
          %291 = vsyncadd [#allocation18], 0
          %s292 = sshll.u32 %s5, 4
          %s293 = int_to_ptr.hbm [resolvable:$true] %s292
          %s294 = sshll.u32 [#allocation17], 4
          %s295 = int_to_ptr.vmem [resolvable:$true] %s294
          %300 = dma.hbm_to_vmem [thread:$0]  %s293, 1024, %s295, [#allocation18], 64, 64, 4
        $region32: #{tpu_custom_call.1} parent=11 // pred_fallthru
          _
        // Predicated region
        $region33: #{tpu_custom_call.1} parent=11 // pred_check
          %p301 = pneg %p190
        $region34: #{tpu_custom_call.1} parent=11 // pred_check_branch
          %303 = sbr.rel (%p301) target = $region36
        $region35: #{tpu_custom_call.1} parent=11 // pred_region
          _
        $region36: #{tpu_custom_call.1} parent=11 // pred_fallthru
          _
      $region12: #{tpu_custom_call.1} parent=5 // pred_fallthru
        _
      %p304 = scmp.lt.s32.totalorder %s22, 3
      // Predicated region
      $region37: #{tpu_custom_call.1} parent=5 // pred_check
        %p305 = pneg %p304
      $region38: #{tpu_custom_call.1} parent=5 // pred_check_branch
        %307 = sbr.rel (%p305) target = $region40
      $region39: #{tpu_custom_call.1} parent=5 // pred_region
        // Predicated region
        $region41: #{tpu_custom_call.1} parent=39 // pred_check
          %p308 = pneg %p58
        $region42: #{tpu_custom_call.1} parent=39 // pred_check_branch
          %310 = sbr.rel (%p308) target = $region44
        $region43: #{tpu_custom_call.1} parent=39 // pred_region
          %s311 = sand.u32 %s48, 1
          %s312 = scalar_lea.sflag [#allocation9], %s311
          %s313 = sand.u32 %s48, 1
          %s314 = smul.addr %s313, 112
          %s315 = scalar_lea.vmem [#allocation8], %s314
          %p316 = scmp.eq.s32.totalorder %s29, 0
          %s317 = scalar_select %p316, %s30, 0
          %s318 = smul.u32 2, %s317
          %320 = vsyncadd %s312, 0
          %s321 = smul.addr %s318, 7
          %s322 = smul.addr %s321, 8
          %s323 = scalar_lea.hbm %s0, %s322
          %s324 = sshll.u32 %s323, 4
          %s325 = int_to_ptr.hbm [resolvable:$true] %s324
          %s326 = sshll.u32 %s315, 4
          %s327 = int_to_ptr.vmem [resolvable:$true] %s326
          %332 = dma.hbm_to_vmem [thread:$0]  %s325, 1792, %s327, %s312, 896, 896, 56
        $region44: #{tpu_custom_call.1} parent=39 // pred_fallthru
          _
      $region40: #{tpu_custom_call.1} parent=5 // pred_fallthru
        _
      %p333 = scmp.le.s32.totalorder 1, %s22
      %p334 = scmp.lt.s32.totalorder %s22, 4
      %p335 = pnand %p333, %p334
      %p336 = pneg %p335
      // Predicated region
      $region45: #{tpu_custom_call.1} parent=5 // pred_check
        _
      $region46: #{tpu_custom_call.1} parent=5 // pred_check_branch
        %338 = sbr.rel (%p335) target = $region48
      $region47: #{tpu_custom_call.1} parent=5 // pred_region
        %s339 = ssub.s32 %s22, 1
        %s340 = sand.u32 %s51, 1
        %s341 = scalar_lea.sflag [#allocation9], %s340
        %s342 = sand.u32 %s51, 1
        %s343 = smul.addr %s342, 112
        %s344 = scalar_lea.vmem [#allocation8], %s343
        // Predicated region
        $region49: #{tpu_custom_call.1} parent=47 // pred_check
          %p345 = pneg %p64
        $region50: #{tpu_custom_call.1} parent=47 // pred_check_branch
          %347 = sbr.rel (%p345) target = $region52
        $region51: #{tpu_custom_call.1} parent=47 // pred_region
          %349 = dma.done %s341, 1792
        $region52: #{tpu_custom_call.1} parent=47 // pred_fallthru
          _
        // Predicated region
        $region53: #{tpu_custom_call.1} parent=47 // pred_check
          %p350 = pneg %p85
        $region54: #{tpu_custom_call.1} parent=47 // pred_check_branch
          %352 = sbr.rel (%p350) target = $region56
        $region55: #{tpu_custom_call.1} parent=47 // pred_region
          %354 = dma.done [#allocation12], 18816
        $region56: #{tpu_custom_call.1} parent=47 // pred_fallthru
          _
        // Predicated region
        $region57: #{tpu_custom_call.1} parent=47 // pred_check
          %p355 = pneg %p106
        $region58: #{tpu_custom_call.1} parent=47 // pred_check_branch
          %357 = sbr.rel (%p355) target = $region60
        $region59: #{tpu_custom_call.1} parent=47 // pred_region
          %359 = dma.done [#allocation12], 192
        $region60: #{tpu_custom_call.1} parent=47 // pred_fallthru
          _
        // Predicated region
        $region61: #{tpu_custom_call.1} parent=47 // pred_check
          %p360 = pneg %p127
        $region62: #{tpu_custom_call.1} parent=47 // pred_check_branch
          %362 = sbr.rel (%p360) target = $region64
        $region63: #{tpu_custom_call.1} parent=47 // pred_region
          %364 = dma.done [#allocation15], 3072
        $region64: #{tpu_custom_call.1} parent=47 // pred_fallthru
          _
        // Predicated region
        $region65: #{tpu_custom_call.1} parent=47 // pred_check
          %p365 = pneg %p148
        $region66: #{tpu_custom_call.1} parent=47 // pred_check_branch
          %367 = sbr.rel (%p365) target = $region68
        $region67: #{tpu_custom_call.1} parent=47 // pred_region
          %369 = dma.done [#allocation15], 64
        $region68: #{tpu_custom_call.1} parent=47 // pred_fallthru
          _
        // Predicated region
        $region69: #{tpu_custom_call.1} parent=47 // pred_check
          %p370 = pneg %p169
        $region70: #{tpu_custom_call.1} parent=47 // pred_check_branch
          %372 = sbr.rel (%p370) target = $region72
        $region71: #{tpu_custom_call.1} parent=47 // pred_region
          %374 = dma.done [#allocation18], 1024
        $region72: #{tpu_custom_call.1} parent=47 // pred_fallthru
          _
        %s375 = sand.u32 %s51, 1
        %s376 = scalar_lea.sflag [#allocation9], %s375
        %s377 = sand.u32 %s51, 1
        %s378 = smul.addr %s377, 112
        %s379 = scalar_lea.vmem [#allocation8], %s378
        %p380 = pneg %p64
        %p381 = pneg %p61
        %p382 = pneg %p85
        %p383 = pneg %p82
        %p384 = pneg %p106
        %p385 = pneg %p103
        %p386 = pneg %p127
        %p387 = pneg %p124
        %p388 = pneg %p148
        %p389 = pneg %p145
        %p390 = pneg %p169
        %p391 = pneg %p166
        %p392 = pneg %p190
        %p393 = pneg %p187
        %p394 = pneg %p220
        %p395 = pneg %p217
        %s396 = sand.u32 %s207, 1
        %s397 = scalar_lea.sflag [#allocation10], %s396
        %s398 = sand.u32 %s207, 1
        %s399 = smul.addr %s398, 16
        %s400 = scalar_lea.vmem [#allocation19], %s399
        %p401 = scmp.eq.s32.totalorder %s31, 0
        %s402 = scalar_select %p401, %s32, 0
        %s403 = smul.u32 2, %s402
        %p404 = scmp.eq.s32.totalorder %s31, 2
        %s405 = scalar_select %p404, %s32, 0
        %s406 = smul.u32 2, %s405
        %s408 = smul.u32 %s32, 16
        %p409 = scmp.eq.s32.totalorder %s31, 0
        // Predicated region
        $region73: #{tpu_custom_call.1} parent=47 // pred_check
          %p410 = pneg %p409
        $region74: #{tpu_custom_call.1} parent=47 // pred_check_branch
          %412 = sbr.rel (%p410) target = $region76
        $region75: #{tpu_custom_call.1} parent=47 // pred_region
          %p413 = scmp.eq.s32.totalorder %s32, 0
          // Predicated region
          $region77: #{tpu_custom_call.1} parent=75 // pred_check
            %p414 = pneg %p413
          $region78: #{tpu_custom_call.1} parent=75 // pred_check_branch
            %416 = sbr.rel (%p414) target = $region80
          $region79: #{tpu_custom_call.1} parent=75 // pred_region
            %417 = vst [vmem:[#allocation4] sm:$0x3f] 0.0
            %418 = vst [vmem:[#allocation6] sm:$0x3] 0.0
          $region80: #{tpu_custom_call.1} parent=75 // pred_fallthru
            _
          %v419 = vld [vmem:[%s344] sm:$0xff]
          %v420 = vld [vmem:[%s344 + $0x8] sm:$0xff]
          %v421 = vld [vmem:[%s344 + $0x10] sm:$0xff]
          %v422 = vld [vmem:[%s344 + $0x18] sm:$0xff]
          %v423 = vld [vmem:[%s344 + $0x20] sm:$0xff]
          %v424 = vld [vmem:[%s344 + $0x28] sm:$0xff]
          %v425 = vld [vmem:[%s344 + $0x30] sm:$0xff]
          %v426 = vld [vmem:[%s344 + $0x38] sm:$0xff]
          %v427 = vld [vmem:[%s344 + $0x40] sm:$0xff]
          %v428 = vld [vmem:[%s344 + $0x48] sm:$0xff]
          %v429 = vld [vmem:[%s344 + $0x50] sm:$0xff]
          %v430 = vld [vmem:[%s344 + $0x58] sm:$0xff]
          %v431 = vld [vmem:[%s344 + $0x60] sm:$0xff]
          %v432 = vld [vmem:[%s344 + $0x68] sm:$0xff]
          %v433 = vpack.c.bf16 %v426, %v419
          %v434 = vpack.c.bf16 %v427, %v420
          %v435 = vpack.c.bf16 %v428, %v421
          %v436 = vpack.c.bf16 %v429, %v422
          %v437 = vpack.c.bf16 %v430, %v423
          %v438 = vpack.c.bf16 %v431, %v424
          %v439 = vpack.c.bf16 %v432, %v425
          %v440 = vld [vmem:[#allocation11] sm:$0xff]
          %v441 = vld [vmem:[#allocation11 + $0x8] sm:$0xf]
          %v442 = vld [vmem:[#allocation11 + $0xc] sm:$0xff]
          %v443 = vld [vmem:[#allocation11 + $0x14] sm:$0xf]
          %v444 = vld [vmem:[#allocation11 + $0x18] sm:$0xff]
          %v445 = vld [vmem:[#allocation11 + $0x20] sm:$0xf]
          %v446 = vld [vmem:[#allocation11 + $0x24] sm:$0xff]
          %v447 = vld [vmem:[#allocation11 + $0x2c] sm:$0xf]
          %v448 = vld [vmem:[#allocation11 + $0x30] sm:$0xff]
          %v449 = vld [vmem:[#allocation11 + $0x38] sm:$0xf]
          %v450 = vld [vmem:[#allocation11 + $0x3c] sm:$0xff]
          %v451 = vld [vmem:[#allocation11 + $0x44] sm:$0xf]
          %v452 = vld [vmem:[#allocation11 + $0x48] sm:$0xff]
          %v453 = vld [vmem:[#allocation11 + $0x50] sm:$0xf]
          %v454 = vld [vmem:[#allocation11 + $0x54] sm:$0xff]
          %v455 = vld [vmem:[#allocation11 + $0x5c] sm:$0xf]
          %v456 = vld [vmem:[#allocation11 + $0x60] sm:$0xff]
          %v457 = vld [vmem:[#allocation11 + $0x68] sm:$0xf]
          %v458 = vld [vmem:[#allocation11 + $0x6c] sm:$0xff]
          %v459 = vld [vmem:[#allocation11 + $0x74] sm:$0xf]
          %v460 = vld [vmem:[#allocation11 + $0x78] sm:$0xff]
          %v461 = vld [vmem:[#allocation11 + $0x80] sm:$0xf]
          %v462 = vld [vmem:[#allocation11 + $0x84] sm:$0xff]
          %v463 = vld [vmem:[#allocation11 + $0x8c] sm:$0xf]
          %v464 = vld [vmem:[#allocation11 + $0x90] sm:$0xff]
          %v465 = vld [vmem:[#allocation11 + $0x98] sm:$0xf]
          %v466 = vld [vmem:[#allocation11 + $0x9c] sm:$0xff]
          %v467 = vld [vmem:[#allocation11 + $0xa4] sm:$0xf]
          %v468 = vld [vmem:[#allocation11 + $0xa8] sm:$0xff]
          %v469 = vld [vmem:[#allocation11 + $0xb0] sm:$0xf]
          %v470 = vld [vmem:[#allocation11 + $0xb4] sm:$0xff]
          %v471 = vld [vmem:[#allocation11 + $0xbc] sm:$0xf]
          %v472 = vld [vmem:[#allocation11 + $0xc0] sm:$0xff]
          %v473 = vld [vmem:[#allocation11 + $0xc8] sm:$0xf]
          %v474 = vld [vmem:[#allocation11 + $0xcc] sm:$0xff]
          %v475 = vld [vmem:[#allocation11 + $0xd4] sm:$0xf]
          %v476 = vld [vmem:[#allocation11 + $0xd8] sm:$0xff]
          %v477 = vld [vmem:[#allocation11 + $0xe0] sm:$0xf]
          %v478 = vld [vmem:[#allocation11 + $0xe4] sm:$0xff]
          %v479 = vld [vmem:[#allocation11 + $0xec] sm:$0xf]
          %v480 = vld [vmem:[#allocation11 + $0xf0] sm:$0xff]
          %v481 = vld [vmem:[#allocation11 + $0xf8] sm:$0xf]
          %v482 = vld [vmem:[#allocation11 + $0xfc] sm:$0xff]
          %v483 = vld [vmem:[#allocation11 + $0x104] sm:$0xf]
          %v484 = vld [vmem:[#allocation11 + $0x108] sm:$0xff]
          %v485 = vld [vmem:[#allocation11 + $0x110] sm:$0xf]
          %v486 = vld [vmem:[#allocation11 + $0x114] sm:$0xff]
          %v487 = vld [vmem:[#allocation11 + $0x11c] sm:$0xf]
          %v488 = vld [vmem:[#allocation11 + $0x120] sm:$0xff]
          %v489 = vld [vmem:[#allocation11 + $0x128] sm:$0xf]
          %v490 = vld [vmem:[#allocation11 + $0x12c] sm:$0xff]
          %v491 = vld [vmem:[#allocation11 + $0x134] sm:$0xf]
          %v492 = vld [vmem:[#allocation11 + $0x138] sm:$0xff]
          %v493 = vld [vmem:[#allocation11 + $0x140] sm:$0xf]
          %v494 = vld [vmem:[#allocation11 + $0x144] sm:$0xff]
          %v495 = vld [vmem:[#allocation11 + $0x14c] sm:$0xf]
          %v496 = vld [vmem:[#allocation11 + $0x150] sm:$0xff]
          %v497 = vld [vmem:[#allocation11 + $0x158] sm:$0xf]
          %v498 = vld [vmem:[#allocation11 + $0x15c] sm:$0xff]
          %v499 = vld [vmem:[#allocation11 + $0x164] sm:$0xf]
          %v500 = vld [vmem:[#allocation11 + $0x168] sm:$0xff]
          %v501 = vld [vmem:[#allocation11 + $0x170] sm:$0xf]
          %v502 = vld [vmem:[#allocation11 + $0x174] sm:$0xff]
          %v503 = vld [vmem:[#allocation11 + $0x17c] sm:$0xf]
          %v504 = vld [vmem:[#allocation11 + $0x180] sm:$0xff]
          %v505 = vld [vmem:[#allocation11 + $0x188] sm:$0xf]
          %v506 = vld [vmem:[#allocation11 + $0x18c] sm:$0xff]
          %v507 = vld [vmem:[#allocation11 + $0x194] sm:$0xf]
          %v508 = vld [vmem:[#allocation11 + $0x198] sm:$0xff]
          %v509 = vld [vmem:[#allocation11 + $0x1a0] sm:$0xf]
          %v510 = vld [vmem:[#allocation11 + $0x1a4] sm:$0xff]
          %v511 = vld [vmem:[#allocation11 + $0x1ac] sm:$0xf]
          %v512 = vld [vmem:[#allocation11 + $0x1b0] sm:$0xff]
          %v513 = vld [vmem:[#allocation11 + $0x1b8] sm:$0xf]
          %v514 = vld [vmem:[#allocation11 + $0x1bc] sm:$0xff]
          %v515 = vld [vmem:[#allocation11 + $0x1c4] sm:$0xf]
          %v516 = vld [vmem:[#allocation11 + $0x1c8] sm:$0xff]
          %v517 = vld [vmem:[#allocation11 + $0x1d0] sm:$0xf]
          %v518 = vld [vmem:[#allocation11 + $0x1d4] sm:$0xff]
          %v519 = vld [vmem:[#allocation11 + $0x1dc] sm:$0xf]
          %v520 = vld [vmem:[#allocation11 + $0x1e0] sm:$0xff]
          %v521 = vld [vmem:[#allocation11 + $0x1e8] sm:$0xf]
          %v522 = vld [vmem:[#allocation11 + $0x1ec] sm:$0xff]
          %v523 = vld [vmem:[#allocation11 + $0x1f4] sm:$0xf]
          %v524 = vld [vmem:[#allocation11 + $0x1f8] sm:$0xff]
          %v525 = vld [vmem:[#allocation11 + $0x200] sm:$0xf]
          %v526 = vld [vmem:[#allocation11 + $0x204] sm:$0xff]
          %v527 = vld [vmem:[#allocation11 + $0x20c] sm:$0xf]
          %v528 = vld [vmem:[#allocation11 + $0x210] sm:$0xff]
          %v529 = vld [vmem:[#allocation11 + $0x218] sm:$0xf]
          %v530 = vld [vmem:[#allocation11 + $0x21c] sm:$0xff]
          %v531 = vld [vmem:[#allocation11 + $0x224] sm:$0xf]
          %v532 = vld [vmem:[#allocation11 + $0x228] sm:$0xff]
          %v533 = vld [vmem:[#allocation11 + $0x230] sm:$0xf]
          %v534 = vld [vmem:[#allocation11 + $0x234] sm:$0xff]
          %v535 = vld [vmem:[#allocation11 + $0x23c] sm:$0xf]
          %v536 = vld [vmem:[#allocation11 + $0x240] sm:$0xff]
          %v537 = vld [vmem:[#allocation11 + $0x248] sm:$0xf]
          %v538 = vld [vmem:[#allocation11 + $0x24c] sm:$0xff]
          %v539 = vld [vmem:[#allocation11 + $0x254] sm:$0xf]
          %v540 = vld [vmem:[#allocation11 + $0x258] sm:$0xff]
          %v541 = vld [vmem:[#allocation11 + $0x260] sm:$0xf]
          %v542 = vld [vmem:[#allocation11 + $0x264] sm:$0xff]
          %v543 = vld [vmem:[#allocation11 + $0x26c] sm:$0xf]
          %v544 = vld [vmem:[#allocation11 + $0x270] sm:$0xff]
          %v545 = vld [vmem:[#allocation11 + $0x278] sm:$0xf]
          %v546 = vld [vmem:[#allocation11 + $0x27c] sm:$0xff]
          %v547 = vld [vmem:[#allocation11 + $0x284] sm:$0xf]
          %v548 = vld [vmem:[#allocation11 + $0x288] sm:$0xff]
          %v549 = vld [vmem:[#allocation11 + $0x290] sm:$0xf]
          %v550 = vld [vmem:[#allocation11 + $0x294] sm:$0xff]
          %v551 = vld [vmem:[#allocation11 + $0x29c] sm:$0xf]
          %v552 = vld [vmem:[#allocation11 + $0x2a0] sm:$0xff]
          %v553 = vld [vmem:[#allocation11 + $0x2a8] sm:$0xf]
          %v554 = vld [vmem:[#allocation11 + $0x2ac] sm:$0xff]
          %v555 = vld [vmem:[#allocation11 + $0x2b4] sm:$0xf]
          %v556 = vld [vmem:[#allocation11 + $0x2b8] sm:$0xff]
          %v557 = vld [vmem:[#allocation11 + $0x2c0] sm:$0xf]
          %v558 = vld [vmem:[#allocation11 + $0x2c4] sm:$0xff]
          %v559 = vld [vmem:[#allocation11 + $0x2cc] sm:$0xf]
          %v560 = vld [vmem:[#allocation11 + $0x2d0] sm:$0xff]
          %v561 = vld [vmem:[#allocation11 + $0x2d8] sm:$0xf]
          %v562 = vld [vmem:[#allocation11 + $0x2dc] sm:$0xff]
          %v563 = vld [vmem:[#allocation11 + $0x2e4] sm:$0xf]
          %v564 = vld [vmem:[#allocation11 + $0x2e8] sm:$0xff]
          %v565 = vld [vmem:[#allocation11 + $0x2f0] sm:$0xf]
          %v566 = vld [vmem:[#allocation11 + $0x2f4] sm:$0xff]
          %v567 = vld [vmem:[#allocation11 + $0x2fc] sm:$0xf]
          %v568 = vld [vmem:[#allocation11 + $0x300] sm:$0xff]
          %v569 = vld [vmem:[#allocation11 + $0x308] sm:$0xf]
          %v570 = vld [vmem:[#allocation11 + $0x30c] sm:$0xff]
          %v571 = vld [vmem:[#allocation11 + $0x314] sm:$0xf]
          %v572 = vld [vmem:[#allocation11 + $0x318] sm:$0xff]
          %v573 = vld [vmem:[#allocation11 + $0x320] sm:$0xf]
          %v574 = vld [vmem:[#allocation11 + $0x324] sm:$0xff]
          %v575 = vld [vmem:[#allocation11 + $0x32c] sm:$0xf]
          %v576 = vld [vmem:[#allocation11 + $0x330] sm:$0xff]
          %v577 = vld [vmem:[#allocation11 + $0x338] sm:$0xf]
          %v578 = vld [vmem:[#allocation11 + $0x33c] sm:$0xff]
          %v579 = vld [vmem:[#allocation11 + $0x344] sm:$0xf]
          %v580 = vld [vmem:[#allocation11 + $0x348] sm:$0xff]
          %v581 = vld [vmem:[#allocation11 + $0x350] sm:$0xf]
          %v582 = vld [vmem:[#allocation11 + $0x354] sm:$0xff]
          %v583 = vld [vmem:[#allocation11 + $0x35c] sm:$0xf]
          %v584 = vld [vmem:[#allocation11 + $0x360] sm:$0xff]
          %v585 = vld [vmem:[#allocation11 + $0x368] sm:$0xf]
          %v586 = vld [vmem:[#allocation11 + $0x36c] sm:$0xff]
          %v587 = vld [vmem:[#allocation11 + $0x374] sm:$0xf]
          %v588 = vld [vmem:[#allocation11 + $0x378] sm:$0xff]
          %v589 = vld [vmem:[#allocation11 + $0x380] sm:$0xf]
          %v590 = vld [vmem:[#allocation11 + $0x384] sm:$0xff]
          %v591 = vld [vmem:[#allocation11 + $0x38c] sm:$0xf]
          %v592 = vld [vmem:[#allocation11 + $0x390] sm:$0xff]
          %v593 = vld [vmem:[#allocation11 + $0x398] sm:$0xf]
          %v594 = vld [vmem:[#allocation11 + $0x39c] sm:$0xff]
          %v595 = vld [vmem:[#allocation11 + $0x3a4] sm:$0xf]
          %v596 = vld [vmem:[#allocation11 + $0x3a8] sm:$0xff]
          %v597 = vld [vmem:[#allocation11 + $0x3b0] sm:$0xf]
          %v598 = vld [vmem:[#allocation11 + $0x3b4] sm:$0xff]
          %v599 = vld [vmem:[#allocation11 + $0x3bc] sm:$0xf]
          %v600 = vld [vmem:[#allocation11 + $0x3c0] sm:$0xff]
          %v601 = vld [vmem:[#allocation11 + $0x3c8] sm:$0xf]
          %v602 = vld [vmem:[#allocation11 + $0x3cc] sm:$0xff]
          %v603 = vld [vmem:[#allocation11 + $0x3d4] sm:$0xf]
          %v604 = vld [vmem:[#allocation11 + $0x3d8] sm:$0xff]
          %v605 = vld [vmem:[#allocation11 + $0x3e0] sm:$0xf]
          %v606 = vld [vmem:[#allocation11 + $0x3e4] sm:$0xff]
          %v607 = vld [vmem:[#allocation11 + $0x3ec] sm:$0xf]
          %v608 = vld [vmem:[#allocation11 + $0x3f0] sm:$0xff]
          %v609 = vld [vmem:[#allocation11 + $0x3f8] sm:$0xf]
          %v610 = vld [vmem:[#allocation11 + $0x3fc] sm:$0xff]
          %v611 = vld [vmem:[#allocation11 + $0x404] sm:$0xf]
          %v612 = vld [vmem:[#allocation11 + $0x408] sm:$0xff]
          %v613 = vld [vmem:[#allocation11 + $0x410] sm:$0xf]
          %v614 = vld [vmem:[#allocation11 + $0x414] sm:$0xff]
          %v615 = vld [vmem:[#allocation11 + $0x41c] sm:$0xf]
          %v616 = vld [vmem:[#allocation11 + $0x420] sm:$0xff]
          %v617 = vld [vmem:[#allocation11 + $0x428] sm:$0xf]
          %v618 = vld [vmem:[#allocation11 + $0x42c] sm:$0xff]
          %v619 = vld [vmem:[#allocation11 + $0x434] sm:$0xf]
          %v620 = vld [vmem:[#allocation11 + $0x438] sm:$0xff]
          %v621 = vld [vmem:[#allocation11 + $0x440] sm:$0xf]
          %v622 = vld [vmem:[#allocation11 + $0x444] sm:$0xff]
          %v623 = vld [vmem:[#allocation11 + $0x44c] sm:$0xf]
          %v624 = vld [vmem:[#allocation11 + $0x450] sm:$0xff]
          %v625 = vld [vmem:[#allocation11 + $0x458] sm:$0xf]
          %v626 = vld [vmem:[#allocation11 + $0x45c] sm:$0xff]
          %v627 = vld [vmem:[#allocation11 + $0x464] sm:$0xf]
          %v628 = vld [vmem:[#allocation11 + $0x468] sm:$0xff]
          %v629 = vld [vmem:[#allocation11 + $0x470] sm:$0xf]
          %v630 = vld [vmem:[#allocation11 + $0x474] sm:$0xff]
          %v631 = vld [vmem:[#allocation11 + $0x47c] sm:$0xf]
          %v632 = vld [vmem:[#allocation11 + $0x480] sm:$0xff]
          %v633 = vld [vmem:[#allocation11 + $0x488] sm:$0xf]
          %v634 = vld [vmem:[#allocation11 + $0x48c] sm:$0xff]
          %v635 = vld [vmem:[#allocation11 + $0x494] sm:$0xf]
          %v636 = vld [vmem:[#allocation13] ss:$4 sm:$0x7]
          %v638 = vperm.slane %v636, 0
          %v639 = vperm.slane %v636, 1
          %v640 = vperm.slane %v636, 2
          %v840 = vunpack.c.l.b16 %v440
          %v841 = vunpack.c.h.b16 %v440
          %v842 = vunpack.c.l.b16 %v441
          %v843 = vunpack.c.l.b16 %v442
          %v844 = vunpack.c.h.b16 %v442
          %v845 = vunpack.c.l.b16 %v443
          %v846 = vunpack.c.l.b16 %v444
          %v847 = vunpack.c.h.b16 %v444
          %v848 = vunpack.c.l.b16 %v445
          %v849 = vunpack.c.l.b16 %v446
          %v850 = vunpack.c.h.b16 %v446
          %v851 = vunpack.c.l.b16 %v447
          %v852 = vunpack.c.l.b16 %v448
          %v853 = vunpack.c.h.b16 %v448
          %v854 = vunpack.c.l.b16 %v449
          %v855 = vunpack.c.l.b16 %v450
          %v856 = vunpack.c.h.b16 %v450
          %v857 = vunpack.c.l.b16 %v451
          %v858 = vunpack.c.l.b16 %v452
          %v859 = vunpack.c.h.b16 %v452
          %v860 = vunpack.c.l.b16 %v453
          %v861 = vunpack.c.l.b16 %v454
          %v862 = vunpack.c.h.b16 %v454
          %v863 = vunpack.c.l.b16 %v455
          %v864 = vunpack.c.l.b16 %v456
          %v865 = vunpack.c.h.b16 %v456
          %v866 = vunpack.c.l.b16 %v457
          %v867 = vunpack.c.l.b16 %v458
          %v868 = vunpack.c.h.b16 %v458
          %v869 = vunpack.c.l.b16 %v459
          %v870 = vunpack.c.l.b16 %v460
          %v871 = vunpack.c.h.b16 %v460
          %v872 = vunpack.c.l.b16 %v461
          %v873 = vunpack.c.l.b16 %v462
          %v874 = vunpack.c.h.b16 %v462
          %v875 = vunpack.c.l.b16 %v463
          %v876 = vunpack.c.l.b16 %v464
          %v877 = vunpack.c.h.b16 %v464
          %v878 = vunpack.c.l.b16 %v465
          %v879 = vunpack.c.l.b16 %v466
          %v880 = vunpack.c.h.b16 %v466
          %v881 = vunpack.c.l.b16 %v467
          %v882 = vunpack.c.l.b16 %v468
          %v883 = vunpack.c.h.b16 %v468
          %v884 = vunpack.c.l.b16 %v469
          %v885 = vunpack.c.l.b16 %v470
          %v886 = vunpack.c.h.b16 %v470
          %v887 = vunpack.c.l.b16 %v471
          %v888 = vunpack.c.l.b16 %v472
          %v889 = vunpack.c.h.b16 %v472
          %v890 = vunpack.c.l.b16 %v473
          %v891 = vunpack.c.l.b16 %v474
          %v892 = vunpack.c.h.b16 %v474
          %v893 = vunpack.c.l.b16 %v475
          %v894 = vunpack.c.l.b16 %v476
          %v895 = vunpack.c.h.b16 %v476
          %v896 = vunpack.c.l.b16 %v477
          %v897 = vunpack.c.l.b16 %v478
          %v898 = vunpack.c.h.b16 %v478
          %v899 = vunpack.c.l.b16 %v479
          %v900 = vunpack.c.l.b16 %v480
          %v901 = vunpack.c.h.b16 %v480
          %v902 = vunpack.c.l.b16 %v481
          %v903 = vunpack.c.l.b16 %v482
          %v904 = vunpack.c.h.b16 %v482
          %v905 = vunpack.c.l.b16 %v483
          %v906 = vunpack.c.l.b16 %v484
          %v907 = vunpack.c.h.b16 %v484
          %v908 = vunpack.c.l.b16 %v485
          %v909 = vunpack.c.l.b16 %v486
          %v910 = vunpack.c.h.b16 %v486
          %v911 = vunpack.c.l.b16 %v487
          %v912 = vunpack.c.l.b16 %v488
          %v913 = vunpack.c.h.b16 %v488
          %v914 = vunpack.c.l.b16 %v489
          %v915 = vunpack.c.l.b16 %v490
          %v916 = vunpack.c.h.b16 %v490
          %v917 = vunpack.c.l.b16 %v491
          %v918 = vunpack.c.l.b16 %v492
          %v919 = vunpack.c.h.b16 %v492
          %v920 = vunpack.c.l.b16 %v493
          %v921 = vunpack.c.l.b16 %v494
          %v922 = vunpack.c.h.b16 %v494
          %v923 = vunpack.c.l.b16 %v495
          %v924 = vunpack.c.l.b16 %v496
          %v925 = vunpack.c.h.b16 %v496
          %v926 = vunpack.c.l.b16 %v497
          %v927 = vunpack.c.l.b16 %v498
          %v928 = vunpack.c.h.b16 %v498
          %v929 = vunpack.c.l.b16 %v499
          %v930 = vunpack.c.l.b16 %v500
          %v931 = vunpack.c.h.b16 %v500
          %v932 = vunpack.c.l.b16 %v501
          %v933 = vunpack.c.l.b16 %v502
          %v934 = vunpack.c.h.b16 %v502
          %v935 = vunpack.c.l.b16 %v503
          %v936 = vunpack.c.l.b16 %v504
          %v937 = vunpack.c.h.b16 %v504
          %v938 = vunpack.c.l.b16 %v505
          %v939 = vunpack.c.l.b16 %v506
          %v940 = vunpack.c.h.b16 %v506
          %v941 = vunpack.c.l.b16 %v507
          %v942 = vunpack.c.l.b16 %v508
          %v943 = vunpack.c.h.b16 %v508
          %v944 = vunpack.c.l.b16 %v509
          %v945 = vunpack.c.l.b16 %v510
          %v946 = vunpack.c.h.b16 %v510
          %v947 = vunpack.c.l.b16 %v511
          %v948 = vunpack.c.l.b16 %v512
          %v949 = vunpack.c.h.b16 %v512
          %v950 = vunpack.c.l.b16 %v513
          %v951 = vunpack.c.l.b16 %v514
          %v952 = vunpack.c.h.b16 %v514
          %v953 = vunpack.c.l.b16 %v515
          %v954 = vunpack.c.l.b16 %v516
          %v955 = vunpack.c.h.b16 %v516
          %v956 = vunpack.c.l.b16 %v517
          %v957 = vunpack.c.l.b16 %v518
          %v958 = vunpack.c.h.b16 %v518
          %v959 = vunpack.c.l.b16 %v519
          %v960 = vunpack.c.l.b16 %v520
          %v961 = vunpack.c.h.b16 %v520
          %v962 = vunpack.c.l.b16 %v521
          %v963 = vunpack.c.l.b16 %v522
          %v964 = vunpack.c.h.b16 %v522
          %v965 = vunpack.c.l.b16 %v523
          %v966 = vunpack.c.l.b16 %v524
          %v967 = vunpack.c.h.b16 %v524
          %v968 = vunpack.c.l.b16 %v525
          %v969 = vunpack.c.l.b16 %v526
          %v970 = vunpack.c.h.b16 %v526
          %v971 = vunpack.c.l.b16 %v527
          %v972 = vunpack.c.l.b16 %v528
          %v973 = vunpack.c.h.b16 %v528
          %v974 = vunpack.c.l.b16 %v529
          %v975 = vunpack.c.l.b16 %v530
          %v976 = vunpack.c.h.b16 %v530
          %v977 = vunpack.c.l.b16 %v531
          %v978 = vunpack.c.l.b16 %v532
          %v979 = vunpack.c.h.b16 %v532
          %v980 = vunpack.c.l.b16 %v533
          %v981 = vunpack.c.l.b16 %v534
          %v982 = vunpack.c.h.b16 %v534
          %v983 = vunpack.c.l.b16 %v535
          %v984 = vunpack.c.l.b16 %v536
          %v985 = vunpack.c.h.b16 %v536
          %v986 = vunpack.c.l.b16 %v537
          %v987 = vunpack.c.l.b16 %v538
          %v988 = vunpack.c.h.b16 %v538
          %v989 = vunpack.c.l.b16 %v539
          %v990 = vunpack.c.l.b16 %v540
          %v991 = vunpack.c.h.b16 %v540
          %v992 = vunpack.c.l.b16 %v541
          %v993 = vunpack.c.l.b16 %v542
          %v994 = vunpack.c.h.b16 %v542
          %v995 = vunpack.c.l.b16 %v543
          %v996 = vunpack.c.l.b16 %v544
          %v997 = vunpack.c.h.b16 %v544
          %v998 = vunpack.c.l.b16 %v545
          %v999 = vunpack.c.l.b16 %v546
          %v1000 = vunpack.c.h.b16 %v546
          %v1001 = vunpack.c.l.b16 %v547
          %v1002 = vunpack.c.l.b16 %v548
          %v1003 = vunpack.c.h.b16 %v548
          %v1004 = vunpack.c.l.b16 %v549
          %v1005 = vunpack.c.l.b16 %v550
          %v1006 = vunpack.c.h.b16 %v550
          %v1007 = vunpack.c.l.b16 %v551
          %v1008 = vunpack.c.l.b16 %v552
          %v1009 = vunpack.c.h.b16 %v552
          %v1010 = vunpack.c.l.b16 %v553
          %v1011 = vunpack.c.l.b16 %v554
          %v1012 = vunpack.c.h.b16 %v554
          %v1013 = vunpack.c.l.b16 %v555
          %v1014 = vunpack.c.l.b16 %v556
          %v1015 = vunpack.c.h.b16 %v556
          %v1016 = vunpack.c.l.b16 %v557
          %v1017 = vunpack.c.l.b16 %v558
          %v1018 = vunpack.c.h.b16 %v558
          %v1019 = vunpack.c.l.b16 %v559
          %v1020 = vunpack.c.l.b16 %v560
          %v1021 = vunpack.c.h.b16 %v560
          %v1022 = vunpack.c.l.b16 %v561
          %v1023 = vunpack.c.l.b16 %v562
          %v1024 = vunpack.c.h.b16 %v562
          %v1025 = vunpack.c.l.b16 %v563
          %v1026 = vunpack.c.l.b16 %v564
          %v1027 = vunpack.c.h.b16 %v564
          %v1028 = vunpack.c.l.b16 %v565
          %v1029 = vunpack.c.l.b16 %v566
          %v1030 = vunpack.c.h.b16 %v566
          %v1031 = vunpack.c.l.b16 %v567
          %v1032 = vunpack.c.l.b16 %v568
          %v1033 = vunpack.c.h.b16 %v568
          %v1034 = vunpack.c.l.b16 %v569
          %v1035 = vunpack.c.l.b16 %v570
          %v1036 = vunpack.c.h.b16 %v570
          %v1037 = vunpack.c.l.b16 %v571
          %v1038 = vunpack.c.l.b16 %v572
          %v1039 = vunpack.c.h.b16 %v572
          %v1040 = vunpack.c.l.b16 %v573
          %v1041 = vunpack.c.l.b16 %v574
          %v1042 = vunpack.c.h.b16 %v574
          %v1043 = vunpack.c.l.b16 %v575
          %v1044 = vunpack.c.l.b16 %v576
          %v1045 = vunpack.c.h.b16 %v576
          %v1046 = vunpack.c.l.b16 %v577
          %v1047 = vunpack.c.l.b16 %v578
          %v1048 = vunpack.c.h.b16 %v578
          %v1049 = vunpack.c.l.b16 %v579
          %v1050 = vunpack.c.l.b16 %v580
          %v1051 = vunpack.c.h.b16 %v580
          %v1052 = vunpack.c.l.b16 %v581
          %v1053 = vunpack.c.l.b16 %v582
          %v1054 = vunpack.c.h.b16 %v582
          %v1055 = vunpack.c.l.b16 %v583
          %v1056 = vunpack.c.l.b16 %v584
          %v1057 = vunpack.c.h.b16 %v584
          %v1058 = vunpack.c.l.b16 %v585
          %v1059 = vunpack.c.l.b16 %v586
          %v1060 = vunpack.c.h.b16 %v586
          %v1061 = vunpack.c.l.b16 %v587
          %v1062 = vunpack.c.l.b16 %v588
          %v1063 = vunpack.c.h.b16 %v588
          %v1064 = vunpack.c.l.b16 %v589
          %v1065 = vunpack.c.l.b16 %v590
          %v1066 = vunpack.c.h.b16 %v590
          %v1067 = vunpack.c.l.b16 %v591
          %v1068 = vunpack.c.l.b16 %v592
          %v1069 = vunpack.c.h.b16 %v592
          %v1070 = vunpack.c.l.b16 %v593
          %v1071 = vunpack.c.l.b16 %v594
          %v1072 = vunpack.c.h.b16 %v594
          %v1073 = vunpack.c.l.b16 %v595
          %v1074 = vunpack.c.l.b16 %v596
          %v1075 = vunpack.c.h.b16 %v596
          %v1076 = vunpack.c.l.b16 %v597
          %v1077 = vunpack.c.l.b16 %v598
          %v1078 = vunpack.c.h.b16 %v598
          %v1079 = vunpack.c.l.b16 %v599
          %v1080 = vunpack.c.l.b16 %v600
          %v1081 = vunpack.c.h.b16 %v600
          %v1082 = vunpack.c.l.b16 %v601
          %v1083 = vunpack.c.l.b16 %v602
          %v1084 = vunpack.c.h.b16 %v602
          %v1085 = vunpack.c.l.b16 %v603
          %v1086 = vunpack.c.l.b16 %v604
          %v1087 = vunpack.c.h.b16 %v604
          %v1088 = vunpack.c.l.b16 %v605
          %v1089 = vunpack.c.l.b16 %v606
          %v1090 = vunpack.c.h.b16 %v606
          %v1091 = vunpack.c.l.b16 %v607
          %v1092 = vunpack.c.l.b16 %v608
          %v1093 = vunpack.c.h.b16 %v608
          %v1094 = vunpack.c.l.b16 %v609
          %v1095 = vunpack.c.l.b16 %v610
          %v1096 = vunpack.c.h.b16 %v610
          %v1097 = vunpack.c.l.b16 %v611
          %v1098 = vunpack.c.l.b16 %v612
          %v1099 = vunpack.c.h.b16 %v612
          %v1100 = vunpack.c.l.b16 %v613
          %v1101 = vunpack.c.l.b16 %v614
          %v1102 = vunpack.c.h.b16 %v614
          %v1103 = vunpack.c.l.b16 %v615
          %v1104 = vunpack.c.l.b16 %v616
          %v1105 = vunpack.c.h.b16 %v616
          %v1106 = vunpack.c.l.b16 %v617
          %v1107 = vunpack.c.l.b16 %v618
          %v1108 = vunpack.c.h.b16 %v618
          %v1109 = vunpack.c.l.b16 %v619
          %v1110 = vunpack.c.l.b16 %v620
          %v1111 = vunpack.c.h.b16 %v620
          %v1112 = vunpack.c.l.b16 %v621
          %v1113 = vunpack.c.l.b16 %v622
          %v1114 = vunpack.c.h.b16 %v622
          %v1115 = vunpack.c.l.b16 %v623
          %v1116 = vunpack.c.l.b16 %v624
          %v1117 = vunpack.c.h.b16 %v624
          %v1118 = vunpack.c.l.b16 %v625
          %v1119 = vunpack.c.l.b16 %v626
          %v1120 = vunpack.c.h.b16 %v626
          %v1121 = vunpack.c.l.b16 %v627
          %v1122 = vunpack.c.l.b16 %v628
          %v1123 = vunpack.c.h.b16 %v628
          %v1124 = vunpack.c.l.b16 %v629
          %v1125 = vunpack.c.l.b16 %v630
          %v1126 = vunpack.c.h.b16 %v630
          %v1127 = vunpack.c.l.b16 %v631
          %v1128 = vunpack.c.l.b16 %v632
          %v1129 = vunpack.c.h.b16 %v632
          %v1130 = vunpack.c.l.b16 %v633
          %v1131 = vunpack.c.l.b16 %v634
          %v1132 = vunpack.c.h.b16 %v634
          %v1133 = vunpack.c.l.b16 %v635
          %v1134 = vpack.c.b16 %v843, %v840
          %v1135 = vpack.c.b16 %v844, %v841
          %v1136 = vpack.c.b16 %v845, %v842
          %v1137 = vpack.c.b16 %v849, %v846
          %v1138 = vpack.c.b16 %v850, %v847
          %v1139 = vpack.c.b16 %v851, %v848
          %v1140 = vpack.c.b16 %v855, %v852
          %v1141 = vpack.c.b16 %v856, %v853
          %v1142 = vpack.c.b16 %v857, %v854
          %v1143 = vpack.c.b16 %v861, %v858
          %v1144 = vpack.c.b16 %v862, %v859
          %v1145 = vpack.c.b16 %v863, %v860
          %v1146 = vpack.c.b16 %v867, %v864
          %v1147 = vpack.c.b16 %v868, %v865
          %v1148 = vpack.c.b16 %v869, %v866
          %v1149 = vpack.c.b16 %v873, %v870
          %v1150 = vpack.c.b16 %v874, %v871
          %v1151 = vpack.c.b16 %v875, %v872
          %v1152 = vpack.c.b16 %v879, %v876
          %v1153 = vpack.c.b16 %v880, %v877
          %v1154 = vpack.c.b16 %v881, %v878
          %v1155 = vpack.c.b16 %v885, %v882
          %v1156 = vpack.c.b16 %v886, %v883
          %v1157 = vpack.c.b16 %v887, %v884
          %v1158 = vpack.c.b16 %v891, %v888
          %v1159 = vpack.c.b16 %v892, %v889
          %v1160 = vpack.c.b16 %v893, %v890
          %v1161 = vpack.c.b16 %v897, %v894
          %v1162 = vpack.c.b16 %v898, %v895
          %v1163 = vpack.c.b16 %v899, %v896
          %v1164 = vpack.c.b16 %v903, %v900
          %v1165 = vpack.c.b16 %v904, %v901
          %v1166 = vpack.c.b16 %v905, %v902
          %v1167 = vpack.c.b16 %v909, %v906
          %v1168 = vpack.c.b16 %v910, %v907
          %v1169 = vpack.c.b16 %v911, %v908
          %v1170 = vpack.c.b16 %v915, %v912
          %v1171 = vpack.c.b16 %v916, %v913
          %v1172 = vpack.c.b16 %v917, %v914
          %v1173 = vpack.c.b16 %v921, %v918
          %v1174 = vpack.c.b16 %v922, %v919
          %v1175 = vpack.c.b16 %v923, %v920
          %v1176 = vpack.c.b16 %v927, %v924
          %v1177 = vpack.c.b16 %v928, %v925
          %v1178 = vpack.c.b16 %v929, %v926
          %v1179 = vpack.c.b16 %v933, %v930
          %v1180 = vpack.c.b16 %v934, %v931
          %v1181 = vpack.c.b16 %v935, %v932
          %v1182 = vpack.c.b16 %v939, %v936
          %v1183 = vpack.c.b16 %v940, %v937
          %v1184 = vpack.c.b16 %v941, %v938
          %v1185 = vpack.c.b16 %v945, %v942
          %v1186 = vpack.c.b16 %v946, %v943
          %v1187 = vpack.c.b16 %v947, %v944
          %v1188 = vpack.c.b16 %v951, %v948
          %v1189 = vpack.c.b16 %v952, %v949
          %v1190 = vpack.c.b16 %v953, %v950
          %v1191 = vpack.c.b16 %v957, %v954
          %v1192 = vpack.c.b16 %v958, %v955
          %v1193 = vpack.c.b16 %v959, %v956
          %v1194 = vpack.c.b16 %v963, %v960
          %v1195 = vpack.c.b16 %v964, %v961
          %v1196 = vpack.c.b16 %v965, %v962
          %v1197 = vpack.c.b16 %v969, %v966
          %v1198 = vpack.c.b16 %v970, %v967
          %v1199 = vpack.c.b16 %v971, %v968
          %v1200 = vpack.c.b16 %v975, %v972
          %v1201 = vpack.c.b16 %v976, %v973
          %v1202 = vpack.c.b16 %v977, %v974
          %v1203 = vpack.c.b16 %v981, %v978
          %v1204 = vpack.c.b16 %v982, %v979
          %v1205 = vpack.c.b16 %v983, %v980
          %v1206 = vpack.c.b16 %v987, %v984
          %v1207 = vpack.c.b16 %v988, %v985
          %v1208 = vpack.c.b16 %v989, %v986
          %v1209 = vpack.c.b16 %v993, %v990
          %v1210 = vpack.c.b16 %v994, %v991
          %v1211 = vpack.c.b16 %v995, %v992
          %v1212 = vpack.c.b16 %v999, %v996
          %v1213 = vpack.c.b16 %v1000, %v997
          %v1214 = vpack.c.b16 %v1001, %v998
          %v1215 = vpack.c.b16 %v1005, %v1002
          %v1216 = vpack.c.b16 %v1006, %v1003
          %v1217 = vpack.c.b16 %v1007, %v1004
          %v1218 = vpack.c.b16 %v1011, %v1008
          %v1219 = vpack.c.b16 %v1012, %v1009
          %v1220 = vpack.c.b16 %v1013, %v1010
          %v1221 = vpack.c.b16 %v1017, %v1014
          %v1222 = vpack.c.b16 %v1018, %v1015
          %v1223 = vpack.c.b16 %v1019, %v1016
          %v1224 = vpack.c.b16 %v1023, %v1020
          %v1225 = vpack.c.b16 %v1024, %v1021
          %v1226 = vpack.c.b16 %v1025, %v1022
          %v1227 = vpack.c.b16 %v1029, %v1026
          %v1228 = vpack.c.b16 %v1030, %v1027
          %v1229 = vpack.c.b16 %v1031, %v1028
          %v1230 = vpack.c.b16 %v1035, %v1032
          %v1231 = vpack.c.b16 %v1036, %v1033
          %v1232 = vpack.c.b16 %v1037, %v1034
          %v1233 = vpack.c.b16 %v1041, %v1038
          %v1234 = vpack.c.b16 %v1042, %v1039
          %v1235 = vpack.c.b16 %v1043, %v1040
          %v1236 = vpack.c.b16 %v1047, %v1044
          %v1237 = vpack.c.b16 %v1048, %v1045
          %v1238 = vpack.c.b16 %v1049, %v1046
          %v1239 = vpack.c.b16 %v1053, %v1050
          %v1240 = vpack.c.b16 %v1054, %v1051
          %v1241 = vpack.c.b16 %v1055, %v1052
          %v1242 = vpack.c.b16 %v1059, %v1056
          %v1243 = vpack.c.b16 %v1060, %v1057
          %v1244 = vpack.c.b16 %v1061, %v1058
          %v1245 = vpack.c.b16 %v1065, %v1062
          %v1246 = vpack.c.b16 %v1066, %v1063
          %v1247 = vpack.c.b16 %v1067, %v1064
          %v1248 = vpack.c.b16 %v1071, %v1068
          %v1249 = vpack.c.b16 %v1072, %v1069
          %v1250 = vpack.c.b16 %v1073, %v1070
          %v1251 = vpack.c.b16 %v1077, %v1074
          %v1252 = vpack.c.b16 %v1078, %v1075
          %v1253 = vpack.c.b16 %v1079, %v1076
          %v1254 = vpack.c.b16 %v1083, %v1080
          %v1255 = vpack.c.b16 %v1084, %v1081
          %v1256 = vpack.c.b16 %v1085, %v1082
          %v1257 = vpack.c.b16 %v1089, %v1086
          %v1258 = vpack.c.b16 %v1090, %v1087
          %v1259 = vpack.c.b16 %v1091, %v1088
          %v1260 = vpack.c.b16 %v1095, %v1092
          %v1261 = vpack.c.b16 %v1096, %v1093
          %v1262 = vpack.c.b16 %v1097, %v1094
          %v1263 = vpack.c.b16 %v1101, %v1098
          %v1264 = vpack.c.b16 %v1102, %v1099
          %v1265 = vpack.c.b16 %v1103, %v1100
          %v1266 = vpack.c.b16 %v1107, %v1104
          %v1267 = vpack.c.b16 %v1108, %v1105
          %v1268 = vpack.c.b16 %v1109, %v1106
          %v1269 = vpack.c.b16 %v1113, %v1110
          %v1270 = vpack.c.b16 %v1114, %v1111
          %v1271 = vpack.c.b16 %v1115, %v1112
          %v1272 = vpack.c.b16 %v1119, %v1116
          %v1273 = vpack.c.b16 %v1120, %v1117
          %v1274 = vpack.c.b16 %v1121, %v1118
          %v1275 = vpack.c.b16 %v1125, %v1122
          %v1276 = vpack.c.b16 %v1126, %v1123
          %v1277 = vpack.c.b16 %v1127, %v1124
          %v1278 = vpack.c.b16 %v1131, %v1128
          %v1279 = vpack.c.b16 %v1132, %v1129
          %v1280 = vpack.c.b16 %v1133, %v1130
          %vm1428 = vcmask 130048
          %v1430 = vsel %vm1428, %v439, 0
          %1432 = vmatpush.bf16.msra.mxu0 %v1155
          %1433 = vmatpush.bf16.msra.mxu0 %v1152
          %1434 = vmatpush.bf16.msra.mxu0 %v1149
          %1435 = vmatpush.bf16.msra.mxu0 %v1146
          %1436 = vmatpush.bf16.msra.mxu0 %v1143
          %1437 = vmatpush.bf16.msra.mxu0 %v1140
          %1438 = vmatpush.bf16.msra.mxu0 %v1137
          %1439 = vmatpush.bf16.msra.mxu0 %v1134
          %1440 = vmatmul.bf16.gmra.mxu0 %v433
          %v1441 = vpop.f32.mrf.mxu0
          %v1442 = vadd.f32 %v638, %v1441
          %v1443 = vpop.f32.mrf.mxu0
          %v1444 = vadd.f32 %v638, %v1443
          %1445 = vdwg.mxu0
          %1446 = vmatpush.bf16.msra.mxu0 %v1179
          %1447 = vmatpush.bf16.msra.mxu0 %v1176
          %1448 = vmatpush.bf16.msra.mxu0 %v1173
          %1449 = vmatpush.bf16.msra.mxu0 %v1170
          %1450 = vmatpush.bf16.msra.mxu0 %v1167
          %1451 = vmatpush.bf16.msra.mxu0 %v1164
          %1452 = vmatpush.bf16.msra.mxu0 %v1161
          %1453 = vmatpush.bf16.msra.mxu0 %v1158
          %1454 = vmatmul.bf16.gmra.mxu0 %v434
          %v1455 = vpop.f32.mrf.mxu0
          %v1456 = vadd.f32 %v1442, %v1455
          %v1457 = vpop.f32.mrf.mxu0
          %v1458 = vadd.f32 %v1444, %v1457
          %1459 = vdwg.mxu0
          %1460 = vmatpush.bf16.msra.mxu0 %v1203
          %1461 = vmatpush.bf16.msra.mxu0 %v1200
          %1462 = vmatpush.bf16.msra.mxu0 %v1197
          %1463 = vmatpush.bf16.msra.mxu0 %v1194
          %1464 = vmatpush.bf16.msra.mxu0 %v1191
          %1465 = vmatpush.bf16.msra.mxu0 %v1188
          %1466 = vmatpush.bf16.msra.mxu0 %v1185
          %1467 = vmatpush.bf16.msra.mxu0 %v1182
          %1468 = vmatmul.bf16.gmra.mxu0 %v435
          %v1469 = vpop.f32.mrf.mxu0
          %v1470 = vadd.f32 %v1456, %v1469
          %v1471 = vpop.f32.mrf.mxu0
          %v1472 = vadd.f32 %v1458, %v1471
          %1473 = vdwg.mxu0
          %1474 = vmatpush.bf16.msra.mxu0 %v1227
          %1475 = vmatpush.bf16.msra.mxu0 %v1224
          %1476 = vmatpush.bf16.msra.mxu0 %v1221
          %1477 = vmatpush.bf16.msra.mxu0 %v1218
          %1478 = vmatpush.bf16.msra.mxu0 %v1215
          %1479 = vmatpush.bf16.msra.mxu0 %v1212
          %1480 = vmatpush.bf16.msra.mxu0 %v1209
          %1481 = vmatpush.bf16.msra.mxu0 %v1206
          %1482 = vmatmul.bf16.gmra.mxu0 %v436
          %v1483 = vpop.f32.mrf.mxu0
          %v1484 = vadd.f32 %v1470, %v1483
          %v1485 = vpop.f32.mrf.mxu0
          %v1486 = vadd.f32 %v1472, %v1485
          %1487 = vdwg.mxu0
          %1488 = vmatpush.bf16.msra.mxu0 %v1251
          %1489 = vmatpush.bf16.msra.mxu0 %v1248
          %1490 = vmatpush.bf16.msra.mxu0 %v1245
          %1491 = vmatpush.bf16.msra.mxu0 %v1242
          %1492 = vmatpush.bf16.msra.mxu0 %v1239
          %1493 = vmatpush.bf16.msra.mxu0 %v1236
          %1494 = vmatpush.bf16.msra.mxu0 %v1233
          %1495 = vmatpush.bf16.msra.mxu0 %v1230
          %1496 = vmatmul.bf16.gmra.mxu0 %v437
          %v1497 = vpop.f32.mrf.mxu0
          %v1498 = vadd.f32 %v1484, %v1497
          %v1499 = vpop.f32.mrf.mxu0
          %v1500 = vadd.f32 %v1486, %v1499
          %1501 = vdwg.mxu0
          %1502 = vmatpush.bf16.msra.mxu0 %v1275
          %1503 = vmatpush.bf16.msra.mxu0 %v1272
          %1504 = vmatpush.bf16.msra.mxu0 %v1269
          %1505 = vmatpush.bf16.msra.mxu0 %v1266
          %1506 = vmatpush.bf16.msra.mxu0 %v1263
          %1507 = vmatpush.bf16.msra.mxu0 %v1260
          %1508 = vmatpush.bf16.msra.mxu0 %v1257
          %1509 = vmatpush.bf16.msra.mxu0 %v1254
          %1510 = vmatmul.bf16.gmra.mxu0 %v438
          %v1511 = vpop.f32.mrf.mxu0
          %v1512 = vadd.f32 %v1498, %v1511
          %v1513 = vpop.f32.mrf.mxu0
          %v1514 = vadd.f32 %v1500, %v1513
          %1515 = vdwg.mxu0
          %1516 = vmatpush.bf16.msra.mxu0 0
          %1517 = vmatpush.bf16.msra.mxu0 0
          %1518 = vmatpush.bf16.msra.mxu0 0
          %1519 = vmatpush.bf16.msra.mxu0 0
          %1520 = vmatpush.bf16.msra.mxu0 0
          %1521 = vmatpush.bf16.msra.mxu0 0
          %1522 = vmatpush.bf16.msra.mxu0 0
          %1523 = vmatpush.bf16.msra.mxu0 %v1278
          %1524 = vmatmul.bf16.gmra.mxu0 %v1430
          %v1525 = vpop.f32.mrf.mxu0
          %v1526 = vadd.f32 %v1512, %v1525
          %v1527 = vpop.f32.mrf.mxu0
          %v1528 = vadd.f32 %v1514, %v1527
          %1529 = vdwg.mxu0
          %1530 = vmatpush.bf16.msra.mxu0 %v1156
          %1531 = vmatpush.bf16.msra.mxu0 %v1153
          %1532 = vmatpush.bf16.msra.mxu0 %v1150
          %1533 = vmatpush.bf16.msra.mxu0 %v1147
          %1534 = vmatpush.bf16.msra.mxu0 %v1144
          %1535 = vmatpush.bf16.msra.mxu0 %v1141
          %1536 = vmatpush.bf16.msra.mxu0 %v1138
          %1537 = vmatpush.bf16.msra.mxu0 %v1135
          %1538 = vmatmul.bf16.gmra.mxu0 %v433
          %v1539 = vpop.f32.mrf.mxu0
          %v1540 = vadd.f32 %v639, %v1539
          %v1541 = vpop.f32.mrf.mxu0
          %v1542 = vadd.f32 %v639, %v1541
          %1543 = vdwg.mxu0
          %1544 = vmatpush.bf16.msra.mxu0 %v1180
          %1545 = vmatpush.bf16.msra.mxu0 %v1177
          %1546 = vmatpush.bf16.msra.mxu0 %v1174
          %1547 = vmatpush.bf16.msra.mxu0 %v1171
          %1548 = vmatpush.bf16.msra.mxu0 %v1168
          %1549 = vmatpush.bf16.msra.mxu0 %v1165
          %1550 = vmatpush.bf16.msra.mxu0 %v1162
          %1551 = vmatpush.bf16.msra.mxu0 %v1159
          %1552 = vmatmul.bf16.gmra.mxu0 %v434
          %v1553 = vpop.f32.mrf.mxu0
          %v1554 = vadd.f32 %v1540, %v1553
          %v1555 = vpop.f32.mrf.mxu0
          %v1556 = vadd.f32 %v1542, %v1555
          %1557 = vdwg.mxu0
          %1558 = vmatpush.bf16.msra.mxu0 %v1204
          %1559 = vmatpush.bf16.msra.mxu0 %v1201
          %1560 = vmatpush.bf16.msra.mxu0 %v1198
          %1561 = vmatpush.bf16.msra.mxu0 %v1195
          %1562 = vmatpush.bf16.msra.mxu0 %v1192
          %1563 = vmatpush.bf16.msra.mxu0 %v1189
          %1564 = vmatpush.bf16.msra.mxu0 %v1186
          %1565 = vmatpush.bf16.msra.mxu0 %v1183
          %1566 = vmatmul.bf16.gmra.mxu0 %v435
          %v1567 = vpop.f32.mrf.mxu0
          %v1568 = vadd.f32 %v1554, %v1567
          %v1569 = vpop.f32.mrf.mxu0
          %v1570 = vadd.f32 %v1556, %v1569
          %1571 = vdwg.mxu0
          %1572 = vmatpush.bf16.msra.mxu0 %v1228
          %1573 = vmatpush.bf16.msra.mxu0 %v1225
          %1574 = vmatpush.bf16.msra.mxu0 %v1222
          %1575 = vmatpush.bf16.msra.mxu0 %v1219
          %1576 = vmatpush.bf16.msra.mxu0 %v1216
          %1577 = vmatpush.bf16.msra.mxu0 %v1213
          %1578 = vmatpush.bf16.msra.mxu0 %v1210
          %1579 = vmatpush.bf16.msra.mxu0 %v1207
          %1580 = vmatmul.bf16.gmra.mxu0 %v436
          %v1581 = vpop.f32.mrf.mxu0
          %v1582 = vadd.f32 %v1568, %v1581
          %v1583 = vpop.f32.mrf.mxu0
          %v1584 = vadd.f32 %v1570, %v1583
          %1585 = vdwg.mxu0
          %1586 = vmatpush.bf16.msra.mxu0 %v1252
          %1587 = vmatpush.bf16.msra.mxu0 %v1249
          %1588 = vmatpush.bf16.msra.mxu0 %v1246
          %1589 = vmatpush.bf16.msra.mxu0 %v1243
          %1590 = vmatpush.bf16.msra.mxu0 %v1240
          %1591 = vmatpush.bf16.msra.mxu0 %v1237
          %1592 = vmatpush.bf16.msra.mxu0 %v1234
          %1593 = vmatpush.bf16.msra.mxu0 %v1231
          %1594 = vmatmul.bf16.gmra.mxu0 %v437
          %v1595 = vpop.f32.mrf.mxu0
          %v1596 = vadd.f32 %v1582, %v1595
          %v1597 = vpop.f32.mrf.mxu0
          %v1598 = vadd.f32 %v1584, %v1597
          %1599 = vdwg.mxu0
          %1600 = vmatpush.bf16.msra.mxu0 %v1276
          %1601 = vmatpush.bf16.msra.mxu0 %v1273
          %1602 = vmatpush.bf16.msra.mxu0 %v1270
          %1603 = vmatpush.bf16.msra.mxu0 %v1267
          %1604 = vmatpush.bf16.msra.mxu0 %v1264
          %1605 = vmatpush.bf16.msra.mxu0 %v1261
          %1606 = vmatpush.bf16.msra.mxu0 %v1258
          %1607 = vmatpush.bf16.msra.mxu0 %v1255
          %1608 = vmatmul.bf16.gmra.mxu0 %v438
          %v1609 = vpop.f32.mrf.mxu0
          %v1610 = vadd.f32 %v1596, %v1609
          %v1611 = vpop.f32.mrf.mxu0
          %v1612 = vadd.f32 %v1598, %v1611
          %1613 = vdwg.mxu0
          %1614 = vmatpush.bf16.msra.mxu0 0
          %1615 = vmatpush.bf16.msra.mxu0 0
          %1616 = vmatpush.bf16.msra.mxu0 0
          %1617 = vmatpush.bf16.msra.mxu0 0
          %1618 = vmatpush.bf16.msra.mxu0 0
          %1619 = vmatpush.bf16.msra.mxu0 0
          %1620 = vmatpush.bf16.msra.mxu0 0
          %1621 = vmatpush.bf16.msra.mxu0 %v1279
          %1622 = vmatmul.bf16.gmra.mxu0 %v1430
          %v1623 = vpop.f32.mrf.mxu0
          %v1624 = vadd.f32 %v1610, %v1623
          %v1625 = vpop.f32.mrf.mxu0
          %v1626 = vadd.f32 %v1612, %v1625
          %1627 = vdwg.mxu0
          %1628 = vmatpush.bf16.msra.mxu0 %v1157
          %1629 = vmatpush.bf16.msra.mxu0 %v1154
          %1630 = vmatpush.bf16.msra.mxu0 %v1151
          %1631 = vmatpush.bf16.msra.mxu0 %v1148
          %1632 = vmatpush.bf16.msra.mxu0 %v1145
          %1633 = vmatpush.bf16.msra.mxu0 %v1142
          %1634 = vmatpush.bf16.msra.mxu0 %v1139
          %1635 = vmatpush.bf16.msra.mxu0 %v1136
          %1636 = vmatmul.bf16.gmra.mxu0 %v433
          %v1637 = vpop.f32.mrf.mxu0
          %v1638 = vadd.f32 %v640, %v1637
          %v1639 = vpop.f32.mrf.mxu0
          %v1640 = vadd.f32 %v640, %v1639
          %1641 = vdwg.mxu0
          %1642 = vmatpush.bf16.msra.mxu0 %v1181
          %1643 = vmatpush.bf16.msra.mxu0 %v1178
          %1644 = vmatpush.bf16.msra.mxu0 %v1175
          %1645 = vmatpush.bf16.msra.mxu0 %v1172
          %1646 = vmatpush.bf16.msra.mxu0 %v1169
          %1647 = vmatpush.bf16.msra.mxu0 %v1166
          %1648 = vmatpush.bf16.msra.mxu0 %v1163
          %1649 = vmatpush.bf16.msra.mxu0 %v1160
          %1650 = vmatmul.bf16.gmra.mxu0 %v434
          %v1651 = vpop.f32.mrf.mxu0
          %v1652 = vadd.f32 %v1638, %v1651
          %v1653 = vpop.f32.mrf.mxu0
          %v1654 = vadd.f32 %v1640, %v1653
          %1655 = vdwg.mxu0
          %1656 = vmatpush.bf16.msra.mxu0 %v1205
          %1657 = vmatpush.bf16.msra.mxu0 %v1202
          %1658 = vmatpush.bf16.msra.mxu0 %v1199
          %1659 = vmatpush.bf16.msra.mxu0 %v1196
          %1660 = vmatpush.bf16.msra.mxu0 %v1193
          %1661 = vmatpush.bf16.msra.mxu0 %v1190
          %1662 = vmatpush.bf16.msra.mxu0 %v1187
          %1663 = vmatpush.bf16.msra.mxu0 %v1184
          %1664 = vmatmul.bf16.gmra.mxu0 %v435
          %v1665 = vpop.f32.mrf.mxu0
          %v1666 = vadd.f32 %v1652, %v1665
          %v1667 = vpop.f32.mrf.mxu0
          %v1668 = vadd.f32 %v1654, %v1667
          %1669 = vdwg.mxu0
          %1670 = vmatpush.bf16.msra.mxu0 %v1229
          %1671 = vmatpush.bf16.msra.mxu0 %v1226
          %1672 = vmatpush.bf16.msra.mxu0 %v1223
          %1673 = vmatpush.bf16.msra.mxu0 %v1220
          %1674 = vmatpush.bf16.msra.mxu0 %v1217
          %1675 = vmatpush.bf16.msra.mxu0 %v1214
          %1676 = vmatpush.bf16.msra.mxu0 %v1211
          %1677 = vmatpush.bf16.msra.mxu0 %v1208
          %1678 = vmatmul.bf16.gmra.mxu0 %v436
          %v1679 = vpop.f32.mrf.mxu0
          %v1680 = vadd.f32 %v1666, %v1679
          %v1681 = vpop.f32.mrf.mxu0
          %v1682 = vadd.f32 %v1668, %v1681
          %1683 = vdwg.mxu0
          %1684 = vmatpush.bf16.msra.mxu0 %v1253
          %1685 = vmatpush.bf16.msra.mxu0 %v1250
          %1686 = vmatpush.bf16.msra.mxu0 %v1247
          %1687 = vmatpush.bf16.msra.mxu0 %v1244
          %1688 = vmatpush.bf16.msra.mxu0 %v1241
          %1689 = vmatpush.bf16.msra.mxu0 %v1238
          %1690 = vmatpush.bf16.msra.mxu0 %v1235
          %1691 = vmatpush.bf16.msra.mxu0 %v1232
          %1692 = vmatmul.bf16.gmra.mxu0 %v437
          %v1693 = vpop.f32.mrf.mxu0
          %v1694 = vadd.f32 %v1680, %v1693
          %v1695 = vpop.f32.mrf.mxu0
          %v1696 = vadd.f32 %v1682, %v1695
          %1697 = vdwg.mxu0
          %1698 = vmatpush.bf16.msra.mxu0 %v1277
          %1699 = vmatpush.bf16.msra.mxu0 %v1274
          %1700 = vmatpush.bf16.msra.mxu0 %v1271
          %1701 = vmatpush.bf16.msra.mxu0 %v1268
          %1702 = vmatpush.bf16.msra.mxu0 %v1265
          %1703 = vmatpush.bf16.msra.mxu0 %v1262
          %1704 = vmatpush.bf16.msra.mxu0 %v1259
          %1705 = vmatpush.bf16.msra.mxu0 %v1256
          %1706 = vmatmul.bf16.gmra.mxu0 %v438
          %v1707 = vpop.f32.mrf.mxu0
          %v1708 = vadd.f32 %v1694, %v1707
          %v1709 = vpop.f32.mrf.mxu0
          %v1710 = vadd.f32 %v1696, %v1709
          %1711 = vdwg.mxu0
          %1712 = vmatpush.bf16.msra.mxu0 0
          %1713 = vmatpush.bf16.msra.mxu0 0
          %1714 = vmatpush.bf16.msra.mxu0 0
          %1715 = vmatpush.bf16.msra.mxu0 0
          %1716 = vmatpush.bf16.msra.mxu0 0
          %1717 = vmatpush.bf16.msra.mxu0 0
          %1718 = vmatpush.bf16.msra.mxu0 0
          %1719 = vmatpush.bf16.msra.mxu0 %v1280
          %1720 = vmatmul.bf16.gmra.mxu0 %v1430
          %v1721 = vpop.f32.mrf.mxu0
          %v1722 = vadd.f32 %v1708, %v1721
          %v1723 = vpop.f32.mrf.mxu0
          %v1724 = vadd.f32 %v1710, %v1723
          %1725 = vdwg.mxu0
          %v1726 = vmax.f32 %v1526, 0.0
          %v1727 = vmax.f32 %v1624, 0.0
          %v1728 = vmax.f32 %v1722, 0.0
          %v1729 = vmax.f32 %v1528, 0.0
          %v1730 = vmax.f32 %v1626, 0.0
          %v1731 = vmax.f32 %v1724, 0.0
          %v1732 = vpack.c.bf16 %v1727, %v1726
          %v1733 = vpack.c.bf16 %v1728, %v1728
          %v1734 = vpack.c.bf16 %v1730, %v1729
          %v1735 = vpack.c.bf16 %v1731, %v1731
          %s1736 = sshra.s32 %s408, 3
          %s1737 = sand.u32 %s408, 7
          %s1738 = smul.u32 %s1736, 3
          %s1739 = smul.addr %s1738, 4
          %s1740 = scalar_lea.vmem [#allocation2], %s1739
          %1741 = vst [vmem:[%s1740] sm:$0xff] %v1732
          %1742 = vst [vmem:[%s1740 + $0x8] sm:$0xf] %v1733
          %1743 = vst [vmem:[%s1740 + $0xc] sm:$0xff] %v1734
          %1744 = vst [vmem:[%s1740 + $0x14] sm:$0xf] %v1735
          %v1745 = vunpack.c.l.bf16 %v1732
          %v1746 = vunpack.c.h.bf16 %v1732
          %v1747 = vunpack.c.l.bf16 %v1733
          %v1748 = vunpack.c.l.bf16 %v1734
          %v1749 = vunpack.c.h.bf16 %v1734
          %v1750 = vunpack.c.l.bf16 %v1735
          %v1751 = vlaneseq
          %v1752 = vshrl.u32 %v1751, 7
          %v1753 = vadd.s32 %v1752, 8
          %v1754 = vstv %s408
          %v1755 = vadd.s32 %v1752, %v1754
          %v1756 = vadd.s32 %v1753, %v1754
          %vm1757 = vcmp.lt.s32.totalorder %v1755, 8
          %vm1758 = vcmp.lt.s32.totalorder %v1756, 8
          %v1759 = vsel %vm1757, 1, 0
          %v1760 = vsel %vm1758, 1, 0
          %vm1761 = vcmp.eq.s32.totalorder %v1759, 1
          %vm1762 = vcmp.eq.s32.totalorder %v1760, 1
          %v1763 = vsel %vm1761, %v1745, 0.0
          %v1764 = vsel %vm1761, %v1746, 0.0
          %v1765 = vsel %vm1761, %v1747, 0.0
          %v1766 = vsel %vm1762, %v1748, 0.0
          %v1767 = vsel %vm1762, %v1749, 0.0
          %v1768 = vsel %vm1762, %v1750, 0.0
          %v1769 = vld [vmem:[#allocation4] ss:$2 sm:$0x7]
          %v1770 = vadd.f32 %v1763, %v1766
          %v1771 = vrot.slane %v1770, 4
          %v1772 = vadd.f32 %v1770, %v1771
          %v1773 = vrot.slane %v1772, 2
          %v1774 = vadd.f32 %v1772, %v1773
          %v1775 = vrot.slane %v1774, 1
          %v1776 = vadd.f32 %v1774, %v1775
          %v1777 = vadd.f32 %v1764, %v1767
          %v1778 = vrot.slane %v1777, 4
          %v1779 = vadd.f32 %v1777, %v1778
          %v1780 = vrot.slane %v1779, 2
          %v1781 = vadd.f32 %v1779, %v1780
          %v1782 = vrot.slane %v1781, 1
          %v1783 = vadd.f32 %v1781, %v1782
          %v1784 = vadd.f32 %v1765, %v1768
          %v1785 = vrot.slane %v1784, 4
          %v1786 = vadd.f32 %v1784, %v1785
          %v1787 = vrot.slane %v1786, 2
          %v1788 = vadd.f32 %v1786, %v1787
          %v1789 = vrot.slane %v1788, 1
          %v1790 = vadd.f32 %v1788, %v1789
          %v1794 = vrot.slane %v1783, 7
          %v1795 = vrot.slane %v1790, 6
          %vm1796 = vcmask 1040384
          %v1797 = vsel %vm1796, %v1776, %v1794
          %vm1798 = vcmask 1041408
          %v1799 = vsel %vm1798, %v1797, %v1795
          %v1801 = vadd.f32 %v1769, %v1799
          %v1802 = vlaneseq
          %vm1803 = vcmp.ge.s32.totalorder %v1802, 0
          %vm1804 = vcmp.lt.s32.totalorder %v1802, 384
          %vm1805 = vmand %vm1803, %vm1804
          %1806 = vst.msk [vmem:[#allocation4] ss:$2 sm:$0x7] %vm1805, %v1801
          %s1807 = scalar_lea.vmem [#allocation4], 1
          %v1808 = vld [vmem:[%s1807] ss:$2 sm:$0x7]
          %v1809 = vmul.f32 %v1763, %v1763
          %v1810 = vmul.f32 %v1764, %v1764
          %v1811 = vmul.f32 %v1765, %v1765
          %v1812 = vmul.f32 %v1766, %v1766
          %v1813 = vmul.f32 %v1767, %v1767
          %v1814 = vmul.f32 %v1768, %v1768
          %v1815 = vadd.f32 %v1809, %v1812
          %v1816 = vrot.slane %v1815, 4
          %v1817 = vadd.f32 %v1815, %v1816
          %v1818 = vrot.slane %v1817, 2
          %v1819 = vadd.f32 %v1817, %v1818
          %v1820 = vrot.slane %v1819, 1
          %v1821 = vadd.f32 %v1819, %v1820
          %v1822 = vadd.f32 %v1810, %v1813
          %v1823 = vrot.slane %v1822, 4
          %v1824 = vadd.f32 %v1822, %v1823
          %v1825 = vrot.slane %v1824, 2
          %v1826 = vadd.f32 %v1824, %v1825
          %v1827 = vrot.slane %v1826, 1
          %v1828 = vadd.f32 %v1826, %v1827
          %v1829 = vadd.f32 %v1811, %v1814
          %v1830 = vrot.slane %v1829, 4
          %v1831 = vadd.f32 %v1829, %v1830
          %v1832 = vrot.slane %v1831, 2
          %v1833 = vadd.f32 %v1831, %v1832
          %v1834 = vrot.slane %v1833, 1
          %v1835 = vadd.f32 %v1833, %v1834
          %v1839 = vrot.slane %v1828, 7
          %v1840 = vrot.slane %v1835, 6
          %v1841 = vsel %vm1796, %v1821, %v1839
          %v1842 = vsel %vm1798, %v1841, %v1840
          %v1844 = vadd.f32 %v1808, %v1842
          %1845 = vst.msk [vmem:[%s1807] ss:$2 sm:$0x7] %vm1805, %v1844
        $region76: #{tpu_custom_call.1} parent=47 // pred_fallthru
          _
        %p1846 = scmp.eq.s32.totalorder %s31, 1
        // Predicated region
        $region81: #{tpu_custom_call.1} parent=47 // pred_check
          %p1847 = pneg %p1846
        $region82: #{tpu_custom_call.1} parent=47 // pred_check_branch
          %1849 = sbr.rel (%p1847) target = $region84
        $region83: #{tpu_custom_call.1} parent=47 // pred_region
          %p1850 = scmp.eq.s32.totalorder %s32, 0
          // Predicated region
          $region85: #{tpu_custom_call.1} parent=83 // pred_check
            %p1851 = pneg %p1850
          $region86: #{tpu_custom_call.1} parent=83 // pred_check_branch
            %1853 = sbr.rel (%p1851) target = $region88
          $region87: #{tpu_custom_call.1} parent=83 // pred_region
            %v1854 = vld [vmem:[#allocation4] ss:$2 sm:$0x7]
            %v1855 = vmul.f32 %v1854, 0.125
            %s1856 = scalar_lea.vmem [#allocation4], 1
            %v1857 = vld [vmem:[%s1856] ss:$2 sm:$0x7]
            %v1858 = vmul.f32 %v1857, 0.125
            %v1859 = vmul.f32 %v1855, %v1855
            %v1860 = vsub.f32 %v1858, %v1859
            %v1861 = vmax.f32 %v1860, 0.0
            %s1862 = scalar_lea.vmem [#allocation13], 1
            %v1863 = vld [vmem:[%s1862] ss:$4 sm:$0x7]
            %v1864 = vadd.f32 %v1861, 1e-05
            %v1865 = vrsqrt.pop %v1864
            %v1866 = vmul.f32 %v1865, %v1864
            %v1867 = vmul.f32 %v1866, %v1865
            %v1868 = vmul.f32 0.5, %v1867
            %v1869 = vsub.f32 1.5, %v1868
            %v1870 = vmul.f32 %v1865, %v1869
            %vm1871 = vweird.f32 %v1864
            %vm1872 = vweird.f32 %v1865
            %vm1873 = vmor %vm1871, %vm1872
            %v1874 = vsel %vm1873, %v1865, %v1870
            %v1875 = vmul.f32 %v1863, %v1874
            %v1876 = vlaneseq
            %vm1877 = vcmp.ge.s32.totalorder %v1876, 0
            %vm1878 = vcmp.lt.s32.totalorder %v1876, 384
            %vm1879 = vmand %vm1877, %vm1878
            %1880 = vst.msk [vmem:[#allocation5] ss:$2 sm:$0x7] %vm1879, %v1875
            %s1881 = scalar_lea.vmem [#allocation13], 2
            %v1882 = vld [vmem:[%s1881] ss:$4 sm:$0x7]
            %v1883 = vmul.f32 %v1855, %v1875
            %v1884 = vsub.f32 %v1882, %v1883
            %s1885 = scalar_lea.vmem [#allocation5], 1
            %1886 = vst.msk [vmem:[%s1885] ss:$2 sm:$0x7] %vm1879, %v1884
          $region88: #{tpu_custom_call.1} parent=83 // pred_fallthru
            _
          %s1887 = sshra.s32 %s408, 3
          %s1888 = sand.u32 %s408, 7
          %s1889 = smul.u32 %s1887, 3
          %s1890 = smul.addr %s1889, 4
          %s1891 = scalar_lea.vmem [#allocation2], %s1890
          %v1892 = vld [vmem:[%s1891] sm:$0xff]
          %v1893 = vld [vmem:[%s1891 + $0x8] sm:$0xf]
          %v1894 = vld [vmem:[%s1891 + $0xc] sm:$0xff]
          %v1895 = vld [vmem:[%s1891 + $0x14] sm:$0xf]
          %v1896 = vunpack.c.l.bf16 %v1892
          %v1897 = vunpack.c.h.bf16 %v1892
          %v1898 = vunpack.c.l.bf16 %v1893
          %v1899 = vunpack.c.l.bf16 %v1894
          %v1900 = vunpack.c.h.bf16 %v1894
          %v1901 = vunpack.c.l.bf16 %v1895
          %v1902 = vld [vmem:[#allocation5] ss:$2 sm:$0x7]
          %v1904 = vperm.slane %v1902, 0
          %v1905 = vperm.slane %v1902, 1
          %v1906 = vperm.slane %v1902, 2
          %v1910 = vmul.f32 %v1896, %v1904
          %v1911 = vmul.f32 %v1897, %v1905
          %v1912 = vmul.f32 %v1898, %v1906
          %v1913 = vmul.f32 %v1899, %v1904
          %v1914 = vmul.f32 %v1900, %v1905
          %v1915 = vmul.f32 %v1901, %v1906
          %s1916 = scalar_lea.vmem [#allocation5], 1
          %v1917 = vld [vmem:[%s1916] ss:$2 sm:$0x7]
          %v1919 = vperm.slane %v1917, 0
          %v1920 = vperm.slane %v1917, 1
          %v1921 = vperm.slane %v1917, 2
          %v1925 = vadd.f32 %v1910, %v1919
          %v1926 = vadd.f32 %v1911, %v1920
          %v1927 = vadd.f32 %v1912, %v1921
          %v1928 = vadd.f32 %v1913, %v1919
          %v1929 = vadd.f32 %v1914, %v1920
          %v1930 = vadd.f32 %v1915, %v1921
          %v1931 = vpack.c.bf16 %v1928, %v1925
          %v1932 = vpack.c.bf16 %v1929, %v1926
          %v1933 = vpack.c.bf16 %v1930, %v1927
          %v1934 = vld [vmem:[#allocation14] sm:$0xf]
          %v1935 = vld [vmem:[#allocation14 + $0x4] sm:$0xf]
          %v1936 = vld [vmem:[#allocation14 + $0x8] sm:$0xf]
          %v1937 = vld [vmem:[#allocation14 + $0xc] sm:$0xf]
          %v1938 = vld [vmem:[#allocation14 + $0x10] sm:$0xf]
          %v1939 = vld [vmem:[#allocation14 + $0x14] sm:$0xf]
          %v1940 = vld [vmem:[#allocation14 + $0x18] sm:$0xf]
          %v1941 = vld [vmem:[#allocation14 + $0x1c] sm:$0xf]
          %v1942 = vld [vmem:[#allocation14 + $0x20] sm:$0xf]
          %v1943 = vld [vmem:[#allocation14 + $0x24] sm:$0xf]
          %v1944 = vld [vmem:[#allocation14 + $0x28] sm:$0xf]
          %v1945 = vld [vmem:[#allocation14 + $0x2c] sm:$0xf]
          %v1946 = vld [vmem:[#allocation14 + $0x30] sm:$0xf]
          %v1947 = vld [vmem:[#allocation14 + $0x34] sm:$0xf]
          %v1948 = vld [vmem:[#allocation14 + $0x38] sm:$0xf]
          %v1949 = vld [vmem:[#allocation14 + $0x3c] sm:$0xf]
          %v1950 = vld [vmem:[#allocation14 + $0x40] sm:$0xf]
          %v1951 = vld [vmem:[#allocation14 + $0x44] sm:$0xf]
          %v1952 = vld [vmem:[#allocation14 + $0x48] sm:$0xf]
          %v1953 = vld [vmem:[#allocation14 + $0x4c] sm:$0xf]
          %v1954 = vld [vmem:[#allocation14 + $0x50] sm:$0xf]
          %v1955 = vld [vmem:[#allocation14 + $0x54] sm:$0xf]
          %v1956 = vld [vmem:[#allocation14 + $0x58] sm:$0xf]
          %v1957 = vld [vmem:[#allocation14 + $0x5c] sm:$0xf]
          %v1958 = vld [vmem:[#allocation14 + $0x60] sm:$0xf]
          %v1959 = vld [vmem:[#allocation14 + $0x64] sm:$0xf]
          %v1960 = vld [vmem:[#allocation14 + $0x68] sm:$0xf]
          %v1961 = vld [vmem:[#allocation14 + $0x6c] sm:$0xf]
          %v1962 = vld [vmem:[#allocation14 + $0x70] sm:$0xf]
          %v1963 = vld [vmem:[#allocation14 + $0x74] sm:$0xf]
          %v1964 = vld [vmem:[#allocation14 + $0x78] sm:$0xf]
          %v1965 = vld [vmem:[#allocation14 + $0x7c] sm:$0xf]
          %v1966 = vld [vmem:[#allocation14 + $0x80] sm:$0xf]
          %v1967 = vld [vmem:[#allocation14 + $0x84] sm:$0xf]
          %v1968 = vld [vmem:[#allocation14 + $0x88] sm:$0xf]
          %v1969 = vld [vmem:[#allocation14 + $0x8c] sm:$0xf]
          %v1970 = vld [vmem:[#allocation14 + $0x90] sm:$0xf]
          %v1971 = vld [vmem:[#allocation14 + $0x94] sm:$0xf]
          %v1972 = vld [vmem:[#allocation14 + $0x98] sm:$0xf]
          %v1973 = vld [vmem:[#allocation14 + $0x9c] sm:$0xf]
          %v1974 = vld [vmem:[#allocation14 + $0xa0] sm:$0xf]
          %v1975 = vld [vmem:[#allocation14 + $0xa4] sm:$0xf]
          %v1976 = vld [vmem:[#allocation14 + $0xa8] sm:$0xf]
          %v1977 = vld [vmem:[#allocation14 + $0xac] sm:$0xf]
          %v1978 = vld [vmem:[#allocation14 + $0xb0] sm:$0xf]
          %v1979 = vld [vmem:[#allocation14 + $0xb4] sm:$0xf]
          %v1980 = vld [vmem:[#allocation14 + $0xb8] sm:$0xf]
          %v1981 = vld [vmem:[#allocation14 + $0xbc] sm:$0xf]
          %v1982 = vld [vmem:[#allocation16] sm:$0x1]
          %v1983 = vperm.slane %v1982, 0
          %v2032 = vunpack.c.l.b16 %v1934
          %v2033 = vunpack.c.l.b16 %v1935
          %v2034 = vunpack.c.l.b16 %v1936
          %v2035 = vunpack.c.l.b16 %v1937
          %v2036 = vunpack.c.l.b16 %v1938
          %v2037 = vunpack.c.l.b16 %v1939
          %v2038 = vunpack.c.l.b16 %v1940
          %v2039 = vunpack.c.l.b16 %v1941
          %v2040 = vunpack.c.l.b16 %v1942
          %v2041 = vunpack.c.l.b16 %v1943
          %v2042 = vunpack.c.l.b16 %v1944
          %v2043 = vunpack.c.l.b16 %v1945
          %v2044 = vunpack.c.l.b16 %v1946
          %v2045 = vunpack.c.l.b16 %v1947
          %v2046 = vunpack.c.l.b16 %v1948
          %v2047 = vunpack.c.l.b16 %v1949
          %v2048 = vunpack.c.l.b16 %v1950
          %v2049 = vunpack.c.l.b16 %v1951
          %v2050 = vunpack.c.l.b16 %v1952
          %v2051 = vunpack.c.l.b16 %v1953
          %v2052 = vunpack.c.l.b16 %v1954
          %v2053 = vunpack.c.l.b16 %v1955
          %v2054 = vunpack.c.l.b16 %v1956
          %v2055 = vunpack.c.l.b16 %v1957
          %v2056 = vunpack.c.l.b16 %v1958
          %v2057 = vunpack.c.l.b16 %v1959
          %v2058 = vunpack.c.l.b16 %v1960
          %v2059 = vunpack.c.l.b16 %v1961
          %v2060 = vunpack.c.l.b16 %v1962
          %v2061 = vunpack.c.l.b16 %v1963
          %v2062 = vunpack.c.l.b16 %v1964
          %v2063 = vunpack.c.l.b16 %v1965
          %v2064 = vunpack.c.l.b16 %v1966
          %v2065 = vunpack.c.l.b16 %v1967
          %v2066 = vunpack.c.l.b16 %v1968
          %v2067 = vunpack.c.l.b16 %v1969
          %v2068 = vunpack.c.l.b16 %v1970
          %v2069 = vunpack.c.l.b16 %v1971
          %v2070 = vunpack.c.l.b16 %v1972
          %v2071 = vunpack.c.l.b16 %v1973
          %v2072 = vunpack.c.l.b16 %v1974
          %v2073 = vunpack.c.l.b16 %v1975
          %v2074 = vunpack.c.l.b16 %v1976
          %v2075 = vunpack.c.l.b16 %v1977
          %v2076 = vunpack.c.l.b16 %v1978
          %v2077 = vunpack.c.l.b16 %v1979
          %v2078 = vunpack.c.l.b16 %v1980
          %v2079 = vunpack.c.l.b16 %v1981
          %v2080 = vpack.c.b16 %v2033, %v2032
          %v2081 = vpack.c.b16 %v2035, %v2034
          %v2082 = vpack.c.b16 %v2037, %v2036
          %v2083 = vpack.c.b16 %v2039, %v2038
          %v2084 = vpack.c.b16 %v2041, %v2040
          %v2085 = vpack.c.b16 %v2043, %v2042
          %v2086 = vpack.c.b16 %v2045, %v2044
          %v2087 = vpack.c.b16 %v2047, %v2046
          %v2088 = vpack.c.b16 %v2049, %v2048
          %v2089 = vpack.c.b16 %v2051, %v2050
          %v2090 = vpack.c.b16 %v2053, %v2052
          %v2091 = vpack.c.b16 %v2055, %v2054
          %v2092 = vpack.c.b16 %v2057, %v2056
          %v2093 = vpack.c.b16 %v2059, %v2058
          %v2094 = vpack.c.b16 %v2061, %v2060
          %v2095 = vpack.c.b16 %v2063, %v2062
          %v2096 = vpack.c.b16 %v2065, %v2064
          %v2097 = vpack.c.b16 %v2067, %v2066
          %v2098 = vpack.c.b16 %v2069, %v2068
          %v2099 = vpack.c.b16 %v2071, %v2070
          %v2100 = vpack.c.b16 %v2073, %v2072
          %v2101 = vpack.c.b16 %v2075, %v2074
          %v2102 = vpack.c.b16 %v2077, %v2076
          %v2103 = vpack.c.b16 %v2079, %v2078
          %2128 = vmatpush.bf16.msra.mxu0 %v2087
          %2129 = vmatpush.bf16.msra.mxu0 %v2086
          %2130 = vmatpush.bf16.msra.mxu0 %v2085
          %2131 = vmatpush.bf16.msra.mxu0 %v2084
          %2132 = vmatpush.bf16.msra.mxu0 %v2083
          %2133 = vmatpush.bf16.msra.mxu0 %v2082
          %2134 = vmatpush.bf16.msra.mxu0 %v2081
          %2135 = vmatpush.bf16.msra.mxu0 %v2080
          %2136 = vmatmul.bf16.gmra.mxu0 %v1931
          %v2137 = vpop.f32.mrf.mxu0
          %v2138 = vadd.f32 %v1983, %v2137
          %v2139 = vpop.f32.mrf.mxu0
          %v2140 = vadd.f32 %v1983, %v2139
          %2141 = vdwg.mxu0
          %2142 = vmatpush.bf16.msra.mxu0 %v2095
          %2143 = vmatpush.bf16.msra.mxu0 %v2094
          %2144 = vmatpush.bf16.msra.mxu0 %v2093
          %2145 = vmatpush.bf16.msra.mxu0 %v2092
          %2146 = vmatpush.bf16.msra.mxu0 %v2091
          %2147 = vmatpush.bf16.msra.mxu0 %v2090
          %2148 = vmatpush.bf16.msra.mxu0 %v2089
          %2149 = vmatpush.bf16.msra.mxu0 %v2088
          %2150 = vmatmul.bf16.gmra.mxu0 %v1932
          %v2151 = vpop.f32.mrf.mxu0
          %v2152 = vadd.f32 %v2138, %v2151
          %v2153 = vpop.f32.mrf.mxu0
          %v2154 = vadd.f32 %v2140, %v2153
          %2155 = vdwg.mxu0
          %2156 = vmatpush.bf16.msra.mxu0 %v2103
          %2157 = vmatpush.bf16.msra.mxu0 %v2102
          %2158 = vmatpush.bf16.msra.mxu0 %v2101
          %2159 = vmatpush.bf16.msra.mxu0 %v2100
          %2160 = vmatpush.bf16.msra.mxu0 %v2099
          %2161 = vmatpush.bf16.msra.mxu0 %v2098
          %2162 = vmatpush.bf16.msra.mxu0 %v2097
          %2163 = vmatpush.bf16.msra.mxu0 %v2096
          %2164 = vmatmul.bf16.gmra.mxu0 %v1933
          %v2165 = vpop.f32.mrf.mxu0
          %v2166 = vadd.f32 %v2152, %v2165
          %v2167 = vpop.f32.mrf.mxu0
          %v2168 = vadd.f32 %v2154, %v2167
          %2169 = vdwg.mxu0
          %v2170 = vmax.f32 %v2166, 0.0
          %v2171 = vmax.f32 %v2168, 0.0
          %v2172 = vpack.c.bf16 %v2170, %v2170
          %v2173 = vpack.c.bf16 %v2171, %v2171
          %s2174 = smul.addr %s1887, 4
          %s2175 = scalar_lea.vmem [#allocation3], %s2174
          %2176 = vst [vmem:[%s2175] sm:$0xf] %v2172
          %2177 = vst [vmem:[%s2175 + $0x4] sm:$0xf] %v2173
          %v2178 = vunpack.c.l.bf16 %v2172
          %v2179 = vunpack.c.l.bf16 %v2173
          %v2180 = vlaneseq
          %v2181 = vshrl.u32 %v2180, 7
          %v2182 = vadd.s32 %v2181, 8
          %v2183 = vstv %s408
          %v2184 = vadd.s32 %v2181, %v2183
          %v2185 = vadd.s32 %v2182, %v2183
          %vm2186 = vcmp.lt.s32.totalorder %v2184, 8
          %vm2187 = vcmp.lt.s32.totalorder %v2185, 8
          %v2188 = vsel %vm2186, 1, 0
          %v2189 = vsel %vm2187, 1, 0
          %vm2190 = vcmp.eq.s32.totalorder %v2188, 1
          %vm2191 = vcmp.eq.s32.totalorder %v2189, 1
          %v2192 = vsel %vm2190, %v2178, 0.0
          %v2193 = vsel %vm2191, %v2179, 0.0
          %v2194 = vld [vmem:[#allocation6] sm:$0x1]
          %v2195 = vadd.f32 %v2192, %v2193
          %v2196 = vrot.slane %v2195, 4
          %v2197 = vadd.f32 %v2195, %v2196
          %v2198 = vrot.slane %v2197, 2
          %v2199 = vadd.f32 %v2197, %v2198
          %v2200 = vrot.slane %v2199, 1
          %v2201 = vadd.f32 %v2199, %v2200
          %v2202 = vadd.f32 %v2194, %v2201
          %2203 = vst [vmem:[#allocation6] sm:$0x1] %v2202
          %v2204 = vld [vmem:[#allocation6 + $0x1] sm:$0x1]
          %v2205 = vmul.f32 %v2192, %v2192
          %v2206 = vmul.f32 %v2193, %v2193
          %v2207 = vadd.f32 %v2205, %v2206
          %v2208 = vrot.slane %v2207, 4
          %v2209 = vadd.f32 %v2207, %v2208
          %v2210 = vrot.slane %v2209, 2
          %v2211 = vadd.f32 %v2209, %v2210
          %v2212 = vrot.slane %v2211, 1
          %v2213 = vadd.f32 %v2211, %v2212
          %v2214 = vadd.f32 %v2204, %v2213
          %2215 = vst [vmem:[#allocation6 + $0x1] sm:$0x1] %v2214
        $region84: #{tpu_custom_call.1} parent=47 // pred_fallthru
          _
        %p2216 = scmp.eq.s32.totalorder %s31, 2
        // Predicated region
        $region89: #{tpu_custom_call.1} parent=47 // pred_check
          %p2217 = pneg %p2216
        $region90: #{tpu_custom_call.1} parent=47 // pred_check_branch
          %2219 = sbr.rel (%p2217) target = $region92
        $region91: #{tpu_custom_call.1} parent=47 // pred_region
          %p2220 = scmp.eq.s32.totalorder %s32, 0
          // Predicated region
          $region93: #{tpu_custom_call.1} parent=91 // pred_check
            %p2221 = pneg %p2220
          $region94: #{tpu_custom_call.1} parent=91 // pred_check_branch
            %2223 = sbr.rel (%p2221) target = $region96
          $region95: #{tpu_custom_call.1} parent=91 // pred_region
            %v2224 = vld [vmem:[#allocation6] sm:$0x1]
            %v2225 = vmul.f32 %v2224, 0.125
            %v2226 = vld [vmem:[#allocation6 + $0x1] sm:$0x1]
            %v2227 = vmul.f32 %v2226, 0.125
            %v2228 = vmul.f32 %v2225, %v2225
            %v2229 = vsub.f32 %v2227, %v2228
            %v2230 = vmax.f32 %v2229, 0.0
            %v2231 = vld [vmem:[#allocation16 + $0x1] sm:$0x1]
            %v2232 = vadd.f32 %v2230, 1e-05
            %v2233 = vrsqrt.pop %v2232
            %v2234 = vmul.f32 %v2233, %v2232
            %v2235 = vmul.f32 %v2234, %v2233
            %v2236 = vmul.f32 0.5, %v2235
            %v2237 = vsub.f32 1.5, %v2236
            %v2238 = vmul.f32 %v2233, %v2237
            %vm2239 = vweird.f32 %v2232
            %vm2240 = vweird.f32 %v2233
            %vm2241 = vmor %vm2239, %vm2240
            %v2242 = vsel %vm2241, %v2233, %v2238
            %v2243 = vmul.f32 %v2231, %v2242
            %2244 = vst [vmem:[#allocation7] sm:$0x1] %v2243
            %v2245 = vld [vmem:[#allocation16 + $0x2] sm:$0x1]
            %v2246 = vmul.f32 %v2225, %v2243
            %v2247 = vsub.f32 %v2245, %v2246
            %2248 = vst [vmem:[#allocation7 + $0x1] sm:$0x1] %v2247
          $region96: #{tpu_custom_call.1} parent=91 // pred_fallthru
            _
          %s2249 = sshra.s32 %s408, 3
          %s2250 = sand.u32 %s408, 7
          %s2251 = smul.addr %s2249, 4
          %s2252 = scalar_lea.vmem [#allocation3], %s2251
          %v2253 = vld [vmem:[%s2252] sm:$0xf]
          %v2254 = vld [vmem:[%s2252 + $0x4] sm:$0xf]
          %v2255 = vunpack.c.l.bf16 %v2253
          %v2256 = vunpack.c.l.bf16 %v2254
          %v2257 = vld [vmem:[#allocation7] sm:$0x1]
          %v2258 = vperm.slane %v2257, 0
          %v2259 = vmul.f32 %v2255, %v2258
          %v2260 = vmul.f32 %v2256, %v2258
          %v2261 = vld [vmem:[#allocation7 + $0x1] sm:$0x1]
          %v2262 = vperm.slane %v2261, 0
          %v2263 = vadd.f32 %v2259, %v2262
          %v2264 = vadd.f32 %v2260, %v2262
          %v2265 = vpack.c.bf16 %v2264, %v2263
          %v2266 = vld [vmem:[#allocation17] sm:$0xf]
          %v2267 = vld [vmem:[#allocation17 + $0x4] sm:$0xf]
          %v2268 = vld [vmem:[#allocation17 + $0x8] sm:$0xf]
          %v2269 = vld [vmem:[#allocation17 + $0xc] sm:$0xf]
          %v2270 = vld [vmem:[#allocation17 + $0x10] sm:$0xf]
          %v2271 = vld [vmem:[#allocation17 + $0x14] sm:$0xf]
          %v2272 = vld [vmem:[#allocation17 + $0x18] sm:$0xf]
          %v2273 = vld [vmem:[#allocation17 + $0x1c] sm:$0xf]
          %v2274 = vld [vmem:[#allocation17 + $0x20] sm:$0xf]
          %v2275 = vld [vmem:[#allocation17 + $0x24] sm:$0xf]
          %v2276 = vld [vmem:[#allocation17 + $0x28] sm:$0xf]
          %v2277 = vld [vmem:[#allocation17 + $0x2c] sm:$0xf]
          %v2278 = vld [vmem:[#allocation17 + $0x30] sm:$0xf]
          %v2279 = vld [vmem:[#allocation17 + $0x34] sm:$0xf]
          %v2280 = vld [vmem:[#allocation17 + $0x38] sm:$0xf]
          %v2281 = vld [vmem:[#allocation17 + $0x3c] sm:$0xf]
          %v2282 = vld [vmem:[%s6] sm:$0x1]
          %v2284 = vperm.slane %v2282, 0
          %v2302 = vunpack.c.l.b16 %v2266
          %v2303 = vunpack.c.l.b16 %v2267
          %v2304 = vunpack.c.l.b16 %v2268
          %v2305 = vunpack.c.l.b16 %v2269
          %v2306 = vunpack.c.l.b16 %v2270
          %v2307 = vunpack.c.l.b16 %v2271
          %v2308 = vunpack.c.l.b16 %v2272
          %v2309 = vunpack.c.l.b16 %v2273
          %v2310 = vunpack.c.l.b16 %v2274
          %v2311 = vunpack.c.l.b16 %v2275
          %v2312 = vunpack.c.l.b16 %v2276
          %v2313 = vunpack.c.l.b16 %v2277
          %v2314 = vunpack.c.l.b16 %v2278
          %v2315 = vunpack.c.l.b16 %v2279
          %v2316 = vunpack.c.l.b16 %v2280
          %v2317 = vunpack.c.l.b16 %v2281
          %v2318 = vpack.c.b16 %v2303, %v2302
          %v2319 = vpack.c.b16 %v2305, %v2304
          %v2320 = vpack.c.b16 %v2307, %v2306
          %v2321 = vpack.c.b16 %v2309, %v2308
          %v2322 = vpack.c.b16 %v2311, %v2310
          %v2323 = vpack.c.b16 %v2313, %v2312
          %v2324 = vpack.c.b16 %v2315, %v2314
          %v2325 = vpack.c.b16 %v2317, %v2316
          %2334 = vmatpush.bf16.msra.mxu0 %v2325
          %2335 = vmatpush.bf16.msra.mxu0 %v2324
          %2336 = vmatpush.bf16.msra.mxu0 %v2323
          %2337 = vmatpush.bf16.msra.mxu0 %v2322
          %2338 = vmatpush.bf16.msra.mxu0 %v2321
          %2339 = vmatpush.bf16.msra.mxu0 %v2320
          %2340 = vmatpush.bf16.msra.mxu0 %v2319
          %2341 = vmatpush.bf16.msra.mxu0 %v2318
          %2342 = vmatmul.bf16.gmra.mxu0 %v2265
          %v2343 = vpop.f32.mrf.mxu0
          %v2344 = vadd.f32 %v2284, %v2343
          %v2345 = vpop.f32.mrf.mxu0
          %v2346 = vadd.f32 %v2284, %v2345
          %2347 = vdwg.mxu0
          %2348 = vst [vmem:[%s400] sm:$0xff] %v2344
          %2349 = vst [vmem:[%s400 + $0x8] sm:$0xff] %v2346
        $region92: #{tpu_custom_call.1} parent=47 // pred_fallthru
          _
        %s2350 = sand.u32 %s207, 1
        %s2351 = scalar_lea.sflag [#allocation10], %s2350
        %s2352 = sand.u32 %s207, 1
        %s2353 = smul.addr %s2352, 16
        %s2354 = scalar_lea.vmem [#allocation19], %s2353
        // Predicated region
        $region97: #{tpu_custom_call.1} parent=47 // pred_check
          %p2355 = pneg %p217
        $region98: #{tpu_custom_call.1} parent=47 // pred_check_branch
          %2357 = sbr.rel (%p2355) target = $region100
        $region99: #{tpu_custom_call.1} parent=47 // pred_region
          %p2358 = scmp.eq.s32.totalorder %s31, 2
          %s2359 = scalar_select %p2358, %s32, 0
          %s2360 = smul.u32 2, %s2359
          %2362 = vsyncadd %s2351, 0
          %s2363 = smul.addr %s2360, 8
          %s2364 = scalar_lea.hbm %s7, %s2363
          %s2365 = sshll.u32 %s2354, 4
          %s2366 = int_to_ptr.vmem [resolvable:$true] %s2365
          %s2367 = sshll.u32 %s2364, 4
          %s2368 = int_to_ptr.hbm [resolvable:$true] %s2367
          %2373 = dma.vmem_to_hbm [thread:$0]  %s2366, 256, %s2368, %s2351, 128, 128, 8
        $region100: #{tpu_custom_call.1} parent=47 // pred_fallthru
          _
      $region48: #{tpu_custom_call.1} parent=5 // pred_fallthru
        _
      %p2374 = scmp.le.s32.totalorder 2, %s22
      // Predicated region
      $region101: #{tpu_custom_call.1} parent=5 // pred_check
        %p2375 = pneg %p2374
      $region102: #{tpu_custom_call.1} parent=5 // pred_check_branch
        %2377 = sbr.rel (%p2375) target = $region104
      $region103: #{tpu_custom_call.1} parent=5 // pred_region
        %s2378 = ssub.s32 %s22, 2
        // Predicated region
        $region105: #{tpu_custom_call.1} parent=103 // pred_check
          %p2379 = pneg %p223
        $region106: #{tpu_custom_call.1} parent=103 // pred_check_branch
          %2381 = sbr.rel (%p2379) target = $region108
        $region107: #{tpu_custom_call.1} parent=103 // pred_region
          %s2382 = sand.u32 %s208, 1
          %s2383 = scalar_lea.sflag [#allocation10], %s2382
          %s2384 = sand.u32 %s208, 1
          %s2385 = smul.addr %s2384, 16
          %s2386 = scalar_lea.vmem [#allocation19], %s2385
          %2388 = dma.done %s2383, 256
        $region108: #{tpu_custom_call.1} parent=103 // pred_fallthru
          _
      $region104: #{tpu_custom_call.1} parent=5 // pred_fallthru
        _
    $region6: #{tpu_custom_call.1} parent=1 // loop_footer
      %s26 = sadd.s32 1, %s22
    $region7: #{tpu_custom_call.1} parent=1 // loop_footer_branch
      %21 = sbr.rel target = $region3
    $region8: #{tpu_custom_call.1} parent=1 // loop_exit
      _
    %2389 = vsyncpa [#allocation9], 1
    %s2390 = scalar_lea.sflag [#allocation9], 1
    %2391 = vsyncpa %s2390, 1
    %2392 = vsyncpa [#allocation12], 1
    %2393 = vsyncpa [#allocation15], 1
    %2394 = vsyncpa [#allocation18], 1
    %2395 = vsyncpa [#allocation10], 1
    %s2396 = scalar_lea.sflag [#allocation10], 1
    %2397 = vsyncpa %s2396, 1

</llo_original>
